<compile_context>
chip_gen: v7x
topology: tpu7x:2x2x1
jax: 0.10.0
libtpu: 0.0.40
codegen_flags: <defaults>
</compile_context>

<pallas_src>
import functools

import numpy as np
import jax
import jax.numpy as jnp
from jax.experimental import pallas as pl
from jax.experimental.pallas import tpu as pltpu


# ----------------------------- kernel ---------------------------------------
def _basic_block_kernel(x_ref, w1_ref, b1_ref, w2_ref, b2_ref, o_ref,
                        xpad_s, mid_s, *, B, H, Ho, KH, dilation, pad):
    """Fused conv1+bn1+relu -> conv2+bn2 -> +residual for B images per step.

    Ref shapes (per grid step):
      x_ref  : (B, H, W*Cin)             f32, lane-packed NHWC (unpadded)
      w1_ref : (KH, W*Cin, Wo*Cout)      bf16, banded, BN1 scale folded in
      b1_ref : (1, Wo*Cout)              f32, bias1 tiled over Wo
      w2_ref : (KH, Wo*Cout, Wo*Cout)    bf16, banded, BN2 scale folded in
      b2_ref : (1, Wo*Cout)              f32
      o_ref  : (B, Ho, Wo*Cout)          f32 (lane-dense output)
      xpad_s : VMEM (B*(H +2p), W*Cin)   bf16  H-halo'd, image-stacked conv1 in
      mid_s  : VMEM (B*(Ho+2p), Wo*Cout) bf16  H-halo'd, image-stacked conv2 in
    """
    f32 = jnp.float32
    bf16 = jnp.bfloat16
    p = pad
    d = dilation
    Hp = H + 2 * p          # per-image padded height (conv1 input)
    Hop = Ho + 2 * p        # per-image padded height (conv2 input)

    # --- zero ONLY the halo rows, ONLY on the first grid step ---------------
    # (interior rows are fully overwritten every step; halo zeros persist in
    #  scratch across the whole grid)
    if p > 0:
        @pl.when(pl.program_id(0) == 0)
        def _zero_halos():
            zx = jnp.zeros((p, xpad_s.shape[1]), bf16)
            zm = jnp.zeros((p, mid_s.shape[1]), bf16)
            for b in range(B):
                xpad_s[pl.ds(b * Hp, p), :] = zx
                xpad_s[pl.ds(b * Hp + p + H, p), :] = zx
                mid_s[pl.ds(b * Hop, p), :] = zm
                mid_s[pl.ds(b * Hop + p + Ho, p), :] = zm

    # --- conv1 + bn1 + relu ---------------------------------------------------
    # Stack the batch block (cast once to bf16) into the halo'd scratch.
    for b in range(B):
        xpad_s[pl.ds(b * Hp + p, H), :] = x_ref[b].astype(bf16)

    # One big matmul per kernel-row tap over the whole stacked buffer.
    # Rows that straddle two images are garbage but are never read back.
    G1 = B * Hp - d * (KH - 1)
    acc1 = jnp.zeros((G1, o_ref.shape[2]), f32)
    for kh in range(KH):
        acc1 = acc1 + jnp.dot(xpad_s[pl.ds(kh * d, G1), :], w1_ref[kh],
                              preferred_element_type=f32)

    # BN1 bias + ReLU on the valid rows only; store bf16 into the conv2 scratch.
    for b in range(B):
        y1 = jnp.maximum(acc1[b * Hp:b * Hp + Ho] + b1_ref[...], 0.0)
        mid_s[pl.ds(b * Hop + p, Ho), :] = y1.astype(bf16)

    # --- conv2 + bn2 (intermediate never leaves VMEM) -------------------------
    G2 = B * Hop - d * (KH - 1)
    acc2 = jnp.zeros((G2, o_ref.shape[2]), f32)
    for kh in range(KH):
        acc2 = acc2 + jnp.dot(mid_s[pl.ds(kh * d, G2), :], w2_ref[kh],
                              preferred_element_type=f32)

    # --- residual add (downsample is None => identity, f32) -------------------
    for b in range(B):
        out = acc2[b * Hop:b * Hop + Ho] + b2_ref[...] + x_ref[b]
        o_ref[b] = out.astype(o_ref.dtype)


# --------------------------- one-time weight prep ----------------------------
def _fold_bn(gamma, beta, mean, var, eps=1e-5):
    scale = gamma / jnp.sqrt(var + eps)
    return scale, beta - mean * scale


def _band_weights(w_hwio, scale, *, w_in, w_out, dilation, pad, dtype):
    """Fold BN scale into the conv weights and expand the KW/W dims into a
    banded matrix so the conv becomes `sum_kh (rows, W*Cin) @ (W*Cin, Wo*Cout)`.
    W-direction zero padding is handled by omitting out-of-range taps.
    (Only worthwhile while Cin is small; see TODO at top for wide layers.)
    """
    KH, KW, Cin, Cout = w_hwio.shape
    w_scaled = w_hwio * scale                              # fold BN scale (Cout)
    sel = np.zeros((KW, w_in, w_out), np.float32)
    for kw in range(KW):
        for wo in range(w_out):
            wi = wo + kw * dilation - pad                  # stride == 1
            if 0 <= wi < w_in:
                sel[kw, wi, wo] = 1.0
    band = jnp.einsum("xwv,kxio->kwivo", jnp.asarray(sel), w_scaled)
    return band.reshape(KH, w_in * Cin, w_out * Cout).astype(dtype)


def _choose_block_batch(N, Hp):
    """Images per grid step: aim for >=128 MXU rows while keeping >=2 grid
    steps (so v7x's two TensorCores still split the work)."""
    target = max(1, -(-128 // Hp))            # ceil(128 / Hp)
    b = min(target, N)
    if N >= 2:
        b = max(1, min(b, N // 2))
    while N % b:
        b -= 1
    return b


def prepare_basic_block(params, *, H, W, stride, pad, dilation):
    """Model-load-time prep (call ONCE): fold BN, build banded bf16 weights,
    tile biases, record static geometry."""
    assert stride == 1, "downsample=None requires stride==1 (identity residual)"
    KH, KW, Cin, Cout = params["w1"].shape
    p = dilation if dilation > 1 else pad                  # convbn() padding rule
    Ho = H + 2 * p - dilation * (KH - 1)
    Wo = W + 2 * p - dilation * (KW - 1)
    # downsample is None => residual must be identity-shaped (also implies
    # conv2, which uses the same pad/dilation, preserves spatial dims).
    assert (H, W, Cin) == (Ho, Wo, Cout), \
        "downsample=None requires shape-preserving convs (inplanes==planes)"

    s1, b1 = _fold_bn(params["gamma1"], params["beta1"], params["mean1"], params["var1"])
    s2, b2 = _fold_bn(params["gamma2"], params["beta2"], params["mean2"], params["var2"])
    w1b = _band_weights(params["w1"], s1, w_in=W, w_out=Wo,
                        dilation=dilation, pad=p, dtype=jnp.bfloat16)
    w2b = _band_weights(params["w2"], s2, w_in=Wo, w_out=Wo,
                        dilation=dilation, pad=p, dtype=jnp.bfloat16)
    return dict(
        w1b=w1b, w2b=w2b,
        b1_row=jnp.tile(b1, Wo).reshape(1, Wo * Cout).astype(jnp.float32),
        b2_row=jnp.tile(b2, Wo).reshape(1, Wo * Cout).astype(jnp.float32),
        H=H, W=W, Ho=Ho, Wo=Wo, Cin=Cin, Cout=Cout, KH=KH,
        pad=p, dilation=dilation,
    )


# ------------------------------- forward --------------------------------------
def basic_block_apply(x_lp, prep):
    """Lane-packed forward: x_lp (N, H, W*Cin) f32 -> (N, Ho, Wo*Cout) f32.
    Keep the whole network in this layout; convert NCHW once at the boundary."""
    H, W, Ho, Wo = prep["H"], prep["W"], prep["Ho"], prep["Wo"]
    Cin, Cout, KH = prep["Cin"], prep["Cout"], prep["KH"]
    p, d = prep["pad"], prep["dilation"]
    N = x_lp.shape[0]
    assert x_lp.shape == (N, H, W * Cin)

    Hp, Hop = H + 2 * p, Ho + 2 * p
    B = _choose_block_batch(N, Hp)
    grid = (N // B,)

    kernel = functools.partial(_basic_block_kernel,
                               B=B, H=H, Ho=Ho, KH=KH, dilation=d, pad=p)

    flops = (2 * N * Ho * KH * (W * Cin) * (Wo * Cout)
             + 2 * N * Ho * KH * (Wo * Cout) * (Wo * Cout))
    bytes_accessed = (x_lp.size * 4 + N * Ho * Wo * Cout * 4
                      + prep["w1b"].size * 2 + prep["w2b"].size * 2
                      + 2 * Wo * Cout * 4)

    return pl.pallas_call(
        kernel,
        out_shape=jax.ShapeDtypeStruct((N, Ho, Wo * Cout), jnp.float32),
        grid=grid,
        in_specs=[
            pl.BlockSpec((B, H, W * Cin), lambda n: (n, 0, 0)),
            # Constant-index weight/bias blocks (resident across the grid).
            pl.BlockSpec((KH, W * Cin, Wo * Cout), lambda n: (0, 0, 0)),
            pl.BlockSpec((1, Wo * Cout), lambda n: (0, 0)),
            pl.BlockSpec((KH, Wo * Cout, Wo * Cout), lambda n: (0, 0, 0)),
            pl.BlockSpec((1, Wo * Cout), lambda n: (0, 0)),
        ],
        out_specs=pl.BlockSpec((B, Ho, Wo * Cout), lambda n: (n, 0, 0)),
        scratch_shapes=[
            pltpu.VMEM((B * Hp, W * Cin), jnp.bfloat16),     # halo'd conv1 input
            pltpu.VMEM((B * Hop, Wo * Cout), jnp.bfloat16),  # halo'd conv2 input
        ],
        compiler_params=pltpu.CompilerParams(
            dimension_semantics=("parallel",),        # v7x: 2 TCs split the batch
            vmem_limit_bytes=32 * 1024 * 1024,
        ),
        cost_estimate=pl.CostEstimate(
            flops=flops, transcendentals=0, bytes_accessed=bytes_accessed),
    )(x_lp, prep["w1b"], prep["b1_row"], prep["w2b"], prep["b2_row"])


# --------------------- boundary layout conversions (once) ---------------------
def nchw_to_lanepacked(x_nchw):
    N, C, H, W = x_nchw.shape
    return jnp.transpose(x_nchw, (0, 2, 3, 1)).reshape(N, H, W * C)


def lanepacked_to_nchw(x_lp, C):
    N, H, WC = x_lp.shape
    return jnp.transpose(x_lp.reshape(N, H, WC // C, C), (0, 3, 1, 2))


# --------------------------- pure-JAX reference -------------------------------
def _ref_basic_block(x_nchw, params, *, stride, pad, dilation):
    """Reference with the same bf16 quantization points as the kernel."""
    x = jnp.transpose(x_nchw, (0, 2, 3, 1))
    p = dilation if dilation > 1 else pad

    def convbn(inp, w, g, b, m, v, s):
        sc = g / jnp.sqrt(v + 1e-5)
        y = jax.lax.conv_general_dilated(
            inp.astype(jnp.bfloat16), (w * sc).astype(jnp.bfloat16),
            window_strides=(s, s), padding=[(p, p), (p, p)],
            rhs_dilation=(dilation, dilation),
            dimension_numbers=("NHWC", "HWIO", "NHWC"),
            preferred_element_type=jnp.float32)
        return y + (b - m * sc)

    out = jnp.maximum(convbn(x, params["w1"], params["gamma1"], params["beta1"],
                             params["mean1"], params["var1"], stride), 0.0)
    out = convbn(out, params["w2"], params["gamma2"], params["beta2"],
                 params["mean2"], params["var2"], 1)
    out = out + x                     # no post-add ReLU in the given module
    return jnp.transpose(out, (0, 3, 1, 2))


# ----------------------------------- test -------------------------------------
if __name__ == "__main__":
    # BasicBlock(inplanes=8, planes=8, stride=1, downsample=None, pad=1, dilation=1)
    N, Cin, H, W = 4, 8, 16, 16          # W*Cin = 128 -> lane-dense
    planes = 8
    stride, pad, dilation = 1, 1, 1

    key = jax.random.PRNGKey(0)
    ks = jax.random.split(key, 11)

    params = {
        # conv weights stored HWIO (KH, KW, Cin, Cout)
        "w1": 0.1 * jax.random.normal(ks[0], (3, 3, Cin, planes), jnp.float32),
        "w2": 0.1 * jax.random.normal(ks[1], (3, 3, planes, planes), jnp.float32),
        "gamma1": 1.0 + 0.1 * jax.random.normal(ks[2], (planes,), jnp.float32),
        "beta1": 0.1 * jax.random.normal(ks[3], (planes,), jnp.float32),
        "mean1": 0.1 * jax.random.normal(ks[4], (planes,), jnp.float32),
        "var1": 1.0 + 0.1 * jax.random.uniform(ks[5], (planes,), jnp.float32),
        "gamma2": 1.0 + 0.1 * jax.random.normal(ks[6], (planes,), jnp.float32),
        "beta2": 0.1 * jax.random.normal(ks[7], (planes,), jnp.float32),
        "mean2": 0.1 * jax.random.normal(ks[8], (planes,), jnp.float32),
        "var2": 1.0 + 0.1 * jax.random.uniform(ks[9], (planes,), jnp.float32),
    }

    x = jax.random.normal(ks[10], (N, Cin, H, W), jnp.float32)

    # One-time prep (hoisted out of the forward path), then jit the forward.
    prep = prepare_basic_block(params, H=H, W=W,
                               stride=stride, pad=pad, dilation=dilation)
    fwd = jax.jit(functools.partial(basic_block_apply, prep=prep))

    x_lp = nchw_to_lanepacked(x)                   # boundary conversion (once)
    out_lp = jax.block_until_ready(fwd(x_lp))
    out = lanepacked_to_nchw(out_lp, planes)       # boundary conversion (once)

    ref = jax.block_until_ready(
        _ref_basic_block(x, params, stride=stride, pad=pad, dilation=dilation))

    assert out.shape == (N, planes, H, W), out.shape
    err = float(jnp.max(jnp.abs(out - ref)))
    assert err < 2e-3, err

    print("KERNEL_OK")
</pallas_src>

<mosaic_0001>
module attributes {stable_mosaic.version = 11 : i64} {
  func.func @_basic_block_kernel(%arg0: i32, %arg1: memref<2x16x128xf32, #tpu.memory_space<vmem>>, %arg2: memref<3x128x128xbf16, #tpu.memory_space<vmem>>, %arg3: memref<1x128xf32, #tpu.memory_space<vmem>>, %arg4: memref<3x128x128xbf16, #tpu.memory_space<vmem>>, %arg5: memref<1x128xf32, #tpu.memory_space<vmem>>, %arg6: memref<2x16x128xf32, #tpu.memory_space<vmem>>, %arg7: memref<36x128xbf16, #tpu.memory_space<vmem>>, %arg8: memref<36x128xbf16, #tpu.memory_space<vmem>>) attributes {dimension_semantics = [#tpu.dimension_semantics<parallel>], iteration_bounds = array<i64: 2>, scalar_prefetch = 0 : i64, scratch_operands = 2 : i64, tpu.core_type = #tpu.core_type<tc>, window_params = [{transform_indices = @transform_0, window_bounds = array<i64: 2, 16, 128>}, {pipeline_mode = #tpu.pipeline_mode<synchronous>, transform_indices = @transform_1, window_bounds = array<i64: 3, 128, 128>}, {pipeline_mode = #tpu.pipeline_mode<synchronous>, transform_indices = @transform_2, window_bounds = array<i64: 1, 128>}, {pipeline_mode = #tpu.pipeline_mode<synchronous>, transform_indices = @transform_3, window_bounds = array<i64: 3, 128, 128>}, {pipeline_mode = #tpu.pipeline_mode<synchronous>, transform_indices = @transform_4, window_bounds = array<i64: 1, 128>}, {transform_indices = @transform_5, window_bounds = array<i64: 2, 16, 128>}]} {
    %c0_i32 = arith.constant 0 : i32
    %0 = arith.cmpi eq, %arg0, %c0_i32 : i32
    %1 = arith.extui %0 : i1 to i32
    %c0_i32_0 = arith.constant 0 : i32
    %2 = arith.cmpi ne, %1, %c0_i32_0 : i32
    scf.if %2 {
      %cst_70 = arith.constant 0.000000e+00 : bf16
      %79 = vector.broadcast %cst_70 : bf16 to vector<1x128xbf16>
      %cst_71 = arith.constant 0.000000e+00 : bf16
      %80 = vector.broadcast %cst_71 : bf16 to vector<1x128xbf16>
      %c0_72 = arith.constant 0 : index
      %c0_73 = arith.constant 0 : index
      %81 = vector.load %arg7[%c0_72, %c0_73] : memref<36x128xbf16, #tpu.memory_space<vmem>>, vector<1x128xbf16>
      tpu.vector_store %arg7[%c0_72, %c0_73], %79 {strides = array<i32>} : memref<36x128xbf16, #tpu.memory_space<vmem>>, vector<1x128xbf16>,
      %c17 = arith.constant 17 : index
      %c0_74 = arith.constant 0 : index
      %82 = vector.load %arg7[%c17, %c0_74] : memref<36x128xbf16, #tpu.memory_space<vmem>>, vector<1x128xbf16>
      tpu.vector_store %arg7[%c17, %c0_74], %79 {strides = array<i32>} : memref<36x128xbf16, #tpu.memory_space<vmem>>, vector<1x128xbf16>,
      %c0_75 = arith.constant 0 : index
      %c0_76 = arith.constant 0 : index
      %83 = vector.load %arg8[%c0_75, %c0_76] : memref<36x128xbf16, #tpu.memory_space<vmem>>, vector<1x128xbf16>
      tpu.vector_store %arg8[%c0_75, %c0_76], %80 {strides = array<i32>} : memref<36x128xbf16, #tpu.memory_space<vmem>>, vector<1x128xbf16>,
      %c17_77 = arith.constant 17 : index
      %c0_78 = arith.constant 0 : index
      %84 = vector.load %arg8[%c17_77, %c0_78] : memref<36x128xbf16, #tpu.memory_space<vmem>>, vector<1x128xbf16>
      tpu.vector_store %arg8[%c17_77, %c0_78], %80 {strides = array<i32>} : memref<36x128xbf16, #tpu.memory_space<vmem>>, vector<1x128xbf16>,
      %c18 = arith.constant 18 : index
      %c0_79 = arith.constant 0 : index
      %85 = vector.load %arg7[%c18, %c0_79] : memref<36x128xbf16, #tpu.memory_space<vmem>>, vector<1x128xbf16>
      tpu.vector_store %arg7[%c18, %c0_79], %79 {strides = array<i32>} : memref<36x128xbf16, #tpu.memory_space<vmem>>, vector<1x128xbf16>,
      %c35 = arith.constant 35 : index
      %c0_80 = arith.constant 0 : index
      %86 = vector.load %arg7[%c35, %c0_80] : memref<36x128xbf16, #tpu.memory_space<vmem>>, vector<1x128xbf16>
      tpu.vector_store %arg7[%c35, %c0_80], %79 {strides = array<i32>} : memref<36x128xbf16, #tpu.memory_space<vmem>>, vector<1x128xbf16>,
      %c18_81 = arith.constant 18 : index
      %c0_82 = arith.constant 0 : index
      %87 = vector.load %arg8[%c18_81, %c0_82] : memref<36x128xbf16, #tpu.memory_space<vmem>>, vector<1x128xbf16>
      tpu.vector_store %arg8[%c18_81, %c0_82], %80 {strides = array<i32>} : memref<36x128xbf16, #tpu.memory_space<vmem>>, vector<1x128xbf16>,
      %c35_83 = arith.constant 35 : index
      %c0_84 = arith.constant 0 : index
      %88 = vector.load %arg8[%c35_83, %c0_84] : memref<36x128xbf16, #tpu.memory_space<vmem>>, vector<1x128xbf16>
      tpu.vector_store %arg8[%c35_83, %c0_84], %80 {strides = array<i32>} : memref<36x128xbf16, #tpu.memory_space<vmem>>, vector<1x128xbf16>,
    } else {
    }
    %c0 = arith.constant 0 : index
    %c0_1 = arith.constant 0 : index
    %c0_2 = arith.constant 0 : index
    %3 = vector.load %arg1[%c0, %c0_1, %c0_2] : memref<2x16x128xf32, #tpu.memory_space<vmem>>, vector<1x16x128xf32>
    %4 = vector.shape_cast %3 : vector<1x16x128xf32> to vector<16x128xf32>
    %5 = arith.truncf %4 : vector<16x128xf32> to vector<16x128xbf16>
    %c1 = arith.constant 1 : index
    %c0_3 = arith.constant 0 : index
    %6 = vector.load %arg7[%c1, %c0_3] : memref<36x128xbf16, #tpu.memory_space<vmem>>, vector<16x128xbf16>
    tpu.vector_store %arg7[%c1, %c0_3], %5 {strides = array<i32>} : memref<36x128xbf16, #tpu.memory_space<vmem>>, vector<16x128xbf16>,
    %c1_4 = arith.constant 1 : index
    %c0_5 = arith.constant 0 : index
    %c0_6 = arith.constant 0 : index
    %7 = vector.load %arg1[%c1_4, %c0_5, %c0_6] : memref<2x16x128xf32, #tpu.memory_space<vmem>>, vector<1x16x128xf32>
    %8 = vector.shape_cast %7 : vector<1x16x128xf32> to vector<16x128xf32>
    %9 = arith.truncf %8 : vector<16x128xf32> to vector<16x128xbf16>
    %c19 = arith.constant 19 : index
    %c0_7 = arith.constant 0 : index
    %10 = vector.load %arg7[%c19, %c0_7] : memref<36x128xbf16, #tpu.memory_space<vmem>>, vector<16x128xbf16>
    tpu.vector_store %arg7[%c19, %c0_7], %9 {strides = array<i32>} : memref<36x128xbf16, #tpu.memory_space<vmem>>, vector<16x128xbf16>,
    %cst = arith.constant 0.000000e+00 : f32
    %11 = vector.broadcast %cst : f32 to vector<34x128xf32>
    %c0_8 = arith.constant 0 : index
    %c0_9 = arith.constant 0 : index
    %12 = vector.load %arg7[%c0_8, %c0_9] : memref<36x128xbf16, #tpu.memory_space<vmem>>, vector<34x128xbf16>
    %c0_10 = arith.constant 0 : index
    %c0_11 = arith.constant 0 : index
    %c0_12 = arith.constant 0 : index
    %13 = vector.load %arg2[%c0_10, %c0_11, %c0_12] : memref<3x128x128xbf16, #tpu.memory_space<vmem>>, vector<1x128x128xbf16>
    %14 = vector.shape_cast %13 : vector<1x128x128xbf16> to vector<128x128xbf16>
    %cst_13 = arith.constant dense<0.000000e+00> : vector<34x128xf32>
    %15 = tpu.matmul %12, %14, %cst_13 {dimension_numbers = #tpu.dot_dimension_numbers<[1], [0], [0], [1], [0, 0, 1, 1], [], []>} : vector<34x128xbf16>, vector<128x128xbf16>, vector<34x128xf32> -> vector<34x128xf32>
    %16 = arith.addf %11, %15 : vector<34x128xf32>
    %c1_14 = arith.constant 1 : index
    %c0_15 = arith.constant 0 : index
    %17 = vector.load %arg7[%c1_14, %c0_15] : memref<36x128xbf16, #tpu.memory_space<vmem>>, vector<34x128xbf16>
    %c1_16 = arith.constant 1 : index
    %c0_17 = arith.constant 0 : index
    %c0_18 = arith.constant 0 : index
    %18 = vector.load %arg2[%c1_16, %c0_17, %c0_18] : memref<3x128x128xbf16, #tpu.memory_space<vmem>>, vector<1x128x128xbf16>
    %19 = vector.shape_cast %18 : vector<1x128x128xbf16> to vector<128x128xbf16>
    %cst_19 = arith.constant dense<0.000000e+00> : vector<34x128xf32>
    %20 = tpu.matmul %17, %19, %cst_19 {dimension_numbers = #tpu.dot_dimension_numbers<[1], [0], [0], [1], [0, 0, 1, 1], [], []>} : vector<34x128xbf16>, vector<128x128xbf16>, vector<34x128xf32> -> vector<34x128xf32>
    %21 = arith.addf %16, %20 : vector<34x128xf32>
    %c2 = arith.constant 2 : index
    %c0_20 = arith.constant 0 : index
    %22 = vector.load %arg7[%c2, %c0_20] : memref<36x128xbf16, #tpu.memory_space<vmem>>, vector<34x128xbf16>
    %c2_21 = arith.constant 2 : index
    %c0_22 = arith.constant 0 : index
    %c0_23 = arith.constant 0 : index
    %23 = vector.load %arg2[%c2_21, %c0_22, %c0_23] : memref<3x128x128xbf16, #tpu.memory_space<vmem>>, vector<1x128x128xbf16>
    %24 = vector.shape_cast %23 : vector<1x128x128xbf16> to vector<128x128xbf16>
    %cst_24 = arith.constant dense<0.000000e+00> : vector<34x128xf32>
    %25 = tpu.matmul %22, %24, %cst_24 {dimension_numbers = #tpu.dot_dimension_numbers<[1], [0], [0], [1], [0, 0, 1, 1], [], []>} : vector<34x128xbf16>, vector<128x128xbf16>, vector<34x128xf32> -> vector<34x128xf32>
    %26 = arith.addf %21, %25 : vector<34x128xf32>
    %27 = vector.extract_strided_slice %26 {offsets = [0, 0], sizes = [16, 128], strides = [1, 1]} : vector<34x128xf32> to vector<16x128xf32>
    %c0_25 = arith.constant 0 : index
    %c0_26 = arith.constant 0 : index
    %28 = vector.load %arg3[%c0_25, %c0_26] : memref<1x128xf32, #tpu.memory_space<vmem>>, vector<1x128xf32>
    %29 = vector.broadcast %28 : vector<1x128xf32> to vector<16x128xf32>
    %30 = arith.addf %27, %29 : vector<16x128xf32>
    %cst_27 = arith.constant 0.000000e+00 : f32
    %31 = vector.broadcast %cst_27 : f32 to vector<16x128xf32>
    %32 = arith.maximumf %30, %31 : vector<16x128xf32>
    %33 = arith.truncf %32 : vector<16x128xf32> to vector<16x128xbf16>
    %c1_28 = arith.constant 1 : index
    %c0_29 = arith.constant 0 : index
    %34 = vector.load %arg8[%c1_28, %c0_29] : memref<36x128xbf16, #tpu.memory_space<vmem>>, vector<16x128xbf16>
    tpu.vector_store %arg8[%c1_28, %c0_29], %33 {strides = array<i32>} : memref<36x128xbf16, #tpu.memory_space<vmem>>, vector<16x128xbf16>,
    %35 = vector.extract_strided_slice %26 {offsets = [18, 0], sizes = [16, 128], strides = [1, 1]} : vector<34x128xf32> to vector<16x128xf32>
    %c0_30 = arith.constant 0 : index
    %c0_31 = arith.constant 0 : index
    %36 = vector.load %arg3[%c0_30, %c0_31] : memref<1x128xf32, #tpu.memory_space<vmem>>, vector<1x128xf32>
    %37 = vector.broadcast %36 : vector<1x128xf32> to vector<16x128xf32>
    %38 = arith.addf %35, %37 : vector<16x128xf32>
    %cst_32 = arith.constant 0.000000e+00 : f32
    %39 = vector.broadcast %cst_32 : f32 to vector<16x128xf32>
    %40 = arith.maximumf %38, %39 : vector<16x128xf32>
    %41 = arith.truncf %40 : vector<16x128xf32> to vector<16x128xbf16>
    %c19_33 = arith.constant 19 : index
    %c0_34 = arith.constant 0 : index
    %42 = vector.load %arg8[%c19_33, %c0_34] : memref<36x128xbf16, #tpu.memory_space<vmem>>, vector<16x128xbf16>
    tpu.vector_store %arg8[%c19_33, %c0_34], %41 {strides = array<i32>} : memref<36x128xbf16, #tpu.memory_space<vmem>>, vector<16x128xbf16>,
    %cst_35 = arith.constant 0.000000e+00 : f32
    %43 = vector.broadcast %cst_35 : f32 to vector<34x128xf32>
    %c0_36 = arith.constant 0 : index
    %c0_37 = arith.constant 0 : index
    %44 = vector.load %arg8[%c0_36, %c0_37] : memref<36x128xbf16, #tpu.memory_space<vmem>>, vector<34x128xbf16>
    %c0_38 = arith.constant 0 : index
    %c0_39 = arith.constant 0 : index
    %c0_40 = arith.constant 0 : index
    %45 = vector.load %arg4[%c0_38, %c0_39, %c0_40] : memref<3x128x128xbf16, #tpu.memory_space<vmem>>, vector<1x128x128xbf16>
    %46 = vector.shape_cast %45 : vector<1x128x128xbf16> to vector<128x128xbf16>
    %cst_41 = arith.constant dense<0.000000e+00> : vector<34x128xf32>
    %47 = tpu.matmul %44, %46, %cst_41 {dimension_numbers = #tpu.dot_dimension_numbers<[1], [0], [0], [1], [0, 0, 1, 1], [], []>} : vector<34x128xbf16>, vector<128x128xbf16>, vector<34x128xf32> -> vector<34x128xf32>
    %48 = arith.addf %43, %47 : vector<34x128xf32>
    %c1_42 = arith.constant 1 : index
    %c0_43 = arith.constant 0 : index
    %49 = vector.load %arg8[%c1_42, %c0_43] : memref<36x128xbf16, #tpu.memory_space<vmem>>, vector<34x128xbf16>
    %c1_44 = arith.constant 1 : index
    %c0_45 = arith.constant 0 : index
    %c0_46 = arith.constant 0 : index
    %50 = vector.load %arg4[%c1_44, %c0_45, %c0_46] : memref<3x128x128xbf16, #tpu.memory_space<vmem>>, vector<1x128x128xbf16>
    %51 = vector.shape_cast %50 : vector<1x128x128xbf16> to vector<128x128xbf16>
    %cst_47 = arith.constant dense<0.000000e+00> : vector<34x128xf32>
    %52 = tpu.matmul %49, %51, %cst_47 {dimension_numbers = #tpu.dot_dimension_numbers<[1], [0], [0], [1], [0, 0, 1, 1], [], []>} : vector<34x128xbf16>, vector<128x128xbf16>, vector<34x128xf32> -> vector<34x128xf32>
    %53 = arith.addf %48, %52 : vector<34x128xf32>
    %c2_48 = arith.constant 2 : index
    %c0_49 = arith.constant 0 : index
    %54 = vector.load %arg8[%c2_48, %c0_49] : memref<36x128xbf16, #tpu.memory_space<vmem>>, vector<34x128xbf16>
    %c2_50 = arith.constant 2 : index
    %c0_51 = arith.constant 0 : index
    %c0_52 = arith.constant 0 : index
    %55 = vector.load %arg4[%c2_50, %c0_51, %c0_52] : memref<3x128x128xbf16, #tpu.memory_space<vmem>>, vector<1x128x128xbf16>
    %56 = vector.shape_cast %55 : vector<1x128x128xbf16> to vector<128x128xbf16>
    %cst_53 = arith.constant dense<0.000000e+00> : vector<34x128xf32>
    %57 = tpu.matmul %54, %56, %cst_53 {dimension_numbers = #tpu.dot_dimension_numbers<[1], [0], [0], [1], [0, 0, 1, 1], [], []>} : vector<34x128xbf16>, vector<128x128xbf16>, vector<34x128xf32> -> vector<34x128xf32>
    %58 = arith.addf %53, %57 : vector<34x128xf32>
    %59 = vector.extract_strided_slice %58 {offsets = [0, 0], sizes = [16, 128], strides = [1, 1]} : vector<34x128xf32> to vector<16x128xf32>
    %c0_54 = arith.constant 0 : index
    %c0_55 = arith.constant 0 : index
    %60 = vector.load %arg5[%c0_54, %c0_55] : memref<1x128xf32, #tpu.memory_space<vmem>>, vector<1x128xf32>
    %61 = vector.broadcast %60 : vector<1x128xf32> to vector<16x128xf32>
    %62 = arith.addf %59, %61 : vector<16x128xf32>
    %c0_56 = arith.constant 0 : index
    %c0_57 = arith.constant 0 : index
    %c0_58 = arith.constant 0 : index
    %63 = vector.load %arg1[%c0_56, %c0_57, %c0_58] : memref<2x16x128xf32, #tpu.memory_space<vmem>>, vector<1x16x128xf32>
    %64 = vector.shape_cast %63 : vector<1x16x128xf32> to vector<16x128xf32>
    %65 = arith.addf %62, %64 : vector<16x128xf32>
    %c0_59 = arith.constant 0 : index
    %c0_60 = arith.constant 0 : index
    %c0_61 = arith.constant 0 : index
    %66 = vector.load %arg6[%c0_59, %c0_60, %c0_61] : memref<2x16x128xf32, #tpu.memory_space<vmem>>, vector<1x16x128xf32>
    %67 = vector.shape_cast %66 : vector<1x16x128xf32> to vector<16x128xf32>
    %68 = vector.shape_cast %65 : vector<16x128xf32> to vector<1x16x128xf32>
    tpu.vector_store %arg6[%c0_59, %c0_60, %c0_61], %68 {strides = array<i32>} : memref<2x16x128xf32, #tpu.memory_space<vmem>>, vector<1x16x128xf32>,
    %69 = vector.extract_strided_slice %58 {offsets = [18, 0], sizes = [16, 128], strides = [1, 1]} : vector<34x128xf32> to vector<16x128xf32>
    %c0_62 = arith.constant 0 : index
    %c0_63 = arith.constant 0 : index
    %70 = vector.load %arg5[%c0_62, %c0_63] : memref<1x128xf32, #tpu.memory_space<vmem>>, vector<1x128xf32>
    %71 = vector.broadcast %70 : vector<1x128xf32> to vector<16x128xf32>
    %72 = arith.addf %69, %71 : vector<16x128xf32>
    %c1_64 = arith.constant 1 : index
    %c0_65 = arith.constant 0 : index
    %c0_66 = arith.constant 0 : index
    %73 = vector.load %arg1[%c1_64, %c0_65, %c0_66] : memref<2x16x128xf32, #tpu.memory_space<vmem>>, vector<1x16x128xf32>
    %74 = vector.shape_cast %73 : vector<1x16x128xf32> to vector<16x128xf32>
    %75 = arith.addf %72, %74 : vector<16x128xf32>
    %c1_67 = arith.constant 1 : index
    %c0_68 = arith.constant 0 : index
    %c0_69 = arith.constant 0 : index
    %76 = vector.load %arg6[%c1_67, %c0_68, %c0_69] : memref<2x16x128xf32, #tpu.memory_space<vmem>>, vector<1x16x128xf32>
    %77 = vector.shape_cast %76 : vector<1x16x128xf32> to vector<16x128xf32>
    %78 = vector.shape_cast %75 : vector<16x128xf32> to vector<1x16x128xf32>
    tpu.vector_store %arg6[%c1_67, %c0_68, %c0_69], %78 {strides = array<i32>} : memref<2x16x128xf32, #tpu.memory_space<vmem>>, vector<1x16x128xf32>,
    return
  }
  func.func @transform_0(%arg0: i32) -> (i32, i32, i32) {
    %c0_i32 = arith.constant 0 : i32
    %c0_i32_0 = arith.constant 0 : i32
    %c0_i32_1 = arith.constant 0 : i32
    return %arg0, %c0_i32, %c0_i32_0 : i32, i32, i32
  }
  func.func @transform_1(%arg0: i32) -> (i32, i32, i32) {
    %c0_i32 = arith.constant 0 : i32
    %c0_i32_0 = arith.constant 0 : i32
    %c0_i32_1 = arith.constant 0 : i32
    %c0_i32_2 = arith.constant 0 : i32
    return %c0_i32, %c0_i32_0, %c0_i32_1 : i32, i32, i32
  }
  func.func @transform_2(%arg0: i32) -> (i32, i32) {
    %c0_i32 = arith.constant 0 : i32
    %c0_i32_0 = arith.constant 0 : i32
    %c0_i32_1 = arith.constant 0 : i32
    return %c0_i32, %c0_i32_0 : i32, i32
  }
  func.func @transform_3(%arg0: i32) -> (i32, i32, i32) {
    %c0_i32 = arith.constant 0 : i32
    %c0_i32_0 = arith.constant 0 : i32
    %c0_i32_1 = arith.constant 0 : i32
    %c0_i32_2 = arith.constant 0 : i32
    return %c0_i32, %c0_i32_0, %c0_i32_1 : i32, i32, i32
  }
  func.func @transform_4(%arg0: i32) -> (i32, i32) {
    %c0_i32 = arith.constant 0 : i32
    %c0_i32_0 = arith.constant 0 : i32
    %c0_i32_1 = arith.constant 0 : i32
    return %c0_i32, %c0_i32_0 : i32, i32
  }
  func.func @transform_5(%arg0: i32) -> (i32, i32, i32) {
    %c0_i32 = arith.constant 0 : i32
    %c0_i32_0 = arith.constant 0 : i32
    %c0_i32_1 = arith.constant 0 : i32
    return %arg0, %c0_i32, %c0_i32_0 : i32, i32, i32
  }
}

</mosaic_0001>

<llo_original>
// kernel: basic_block_apply.1
$region0: #{basic_block_apply.1}
  #allocation0 [shape = 'u32[]', space=smem, size = 0x4, offset = 0x4, fixed_abs, tag = 'smem constant byte address 0x4 - core index']
  #allocation1 [shape = 'u32[144,128]{1,0:T(1,128)}', space=vmem, size = 0x12000, scoped, tag = 'internal scratch']
  #allocation2 [shape = 'bf16[36,128]{1,0:T(8,128)(2,1)}', space=vmem, size = 0x2800, scoped, tag = 'scratch operand']
  #allocation3 [shape = 'bf16[36,128]{1,0:T(8,128)(2,1)}', space=vmem, size = 0x2800, scoped, tag = 'scratch operand']
  %s0 = inlined_call_operand.hbm [shape: f32[4,16,128], index: 0, kind: input, shape index: {}]
  %s1 = inlined_call_operand.hbm [shape: bf16[3,128,128], index: 1, kind: input, shape index: {}]
  %s2 = inlined_call_operand.vmem [shape: f32[1,128], index: 2, kind: input, shape index: {}]
  %s3 = inlined_call_operand.hbm [shape: bf16[3,128,128], index: 3, kind: input, shape index: {}]
  %s4 = inlined_call_operand.vmem [shape: f32[1,128], index: 4, kind: input, shape index: {}]
  %s5 = inlined_call_operand.hbm [shape: f32[4,16,128], index: 5, kind: output, shape index: {}]
  %s6 = sld [smem:[#allocation0]]
  $region69: #{basic_block_apply.1} parent=0
    _
  %s8 = ssub.s32 1, %s6
  %s9 = scalar_select 0, %s8, %s6
  $region1: #{basic_block_apply.1} parent=0
    #allocation4 [shape = 'u8[32768]{0}', space=vmem, size = 0x8000, scoped, tag = 'input window, operand 0']
    #allocation5 [shape = 's32[2]{0}', space=sflag, size = 0x8, scoped, tag = 'scoped memory for basic_block_apply.1']
    #allocation6 [shape = 's32[2]{0}', space=sflag, size = 0x8, scoped, tag = 'scoped memory for basic_block_apply.1']
    #allocation7 [shape = 'u8[98304]{0}', space=vmem, size = 0x18000, scoped, tag = 'input window, operand 1, single buffered']
    #allocation8 [shape = 's32[1]{0}', space=sflag, size = 0x4, scoped, tag = 'scoped memory for basic_block_apply.1']
    #allocation9 [shape = 'u8[98304]{0}', space=vmem, size = 0x18000, scoped, tag = 'input window, operand 3, single buffered']
    #allocation10 [shape = 'u8[32768]{0}', space=vmem, size = 0x8000, scoped, tag = 'output window, operand 0']
    %10 = vsyncpa [#allocation5], 0
    %s11 = scalar_lea.sflag [#allocation5], 1
    %12 = vsyncpa %s11, 0
    %13 = vsyncpa [#allocation8], 0
    %14 = vsyncpa [#allocation6], 0
    %s15 = scalar_lea.sflag [#allocation6], 1
    %16 = vsyncpa %s15, 0
    loop: start=0, step=1, limit=4
    $region2: #{basic_block_apply.1} parent=1 // loop_pre_header
      _
    $region3: #{basic_block_apply.1} parent=1 // loop_header
      %s18 = sphi 0, %s22
      %p19 = scmp.ge.s32.totalorder %s18, 4
      %s28 = sphi 0, %s30
      %s31 = sphi 0, %s28
      %s32 = sphi 0, %s31
      %s48 = sphi 0, %s32
      %s52 = sphi 0, %s52
      %s54 = sphi 0, %s52
      %s55 = sphi 0, %s54
      %s69 = sphi 0, %s55
      %s73 = sphi 0, %s73
      %s75 = sphi 0, %s73
      %s76 = sphi 0, %s75
      %s90 = sphi 0, %s76
      %s94 = sphi 0, %s94
      %s96 = sphi 0, %s94
      %s97 = sphi 0, %s96
      %s111 = sphi 0, %s97
      %s115 = sphi 0, %s115
      %s117 = sphi 0, %s115
      %s118 = sphi 0, %s117
      %s132 = sphi 0, %s118
      %s138 = sphi 0, %s140
      %s141 = sphi 0, %s138
      %s142 = sphi 0, %s141
      %s158 = sphi 0, %s142
    $region4: #{basic_block_apply.1} parent=1 // loop_header_branch
      %21 = sbr.rel (%p19) target = $region8
    $region5: #{basic_block_apply.1} parent=1 // loop_body
      %s23 = ssub.s32 %s18, 1
      %s24 = ssub.s32 %s18, 2
      %s25 = sadd.s32 %s18, 1
      %s26 = ssub.s32 %s18, %s25
      %p27 = scmp.eq.s32.totalorder %s26, 0
      %s29 = sadd.s32 %s28, 1
      %s30 = scalar_select %p27, %s28, %s29
      %p33 = pneg %p27
      %p34 = scmp.eq.s32.totalorder %s18, 1
      %p35 = por %p33, %p34
      %p36 = scmp.ne.s32.totalorder %s28, %s31
      %p37 = scmp.eq.s32.totalorder %s18, 0
      %p38 = por %p36, %p37
      %p39 = scmp.ne.s32.totalorder %s28, %s31
      %p40 = scmp.eq.s32.totalorder %s23, 1
      %p41 = por %p39, %p40
      %p42 = scmp.ne.s32.totalorder %s31, %s32
      %p43 = scmp.eq.s32.totalorder %s23, 0
      %p44 = por %p42, %p43
      %p45 = scmp.ne.s32.totalorder %s31, %s32
      %p46 = scmp.eq.s32.totalorder %s24, 1
      %p47 = por %p45, %p46
      %p49 = scmp.ne.s32.totalorder %s32, %s48
      %p50 = scmp.eq.s32.totalorder %s24, 0
      %p51 = por %p49, %p50
      %s53 = sadd.s32 %s52, 1
      %p56 = scmp.eq.s32.totalorder %s18, 1
      %p57 = scmp.ne.s32.totalorder %s52, %s54
      %p58 = scmp.eq.s32.totalorder %s18, 0
      %p59 = por %p57, %p58
      %p60 = scmp.ne.s32.totalorder %s52, %s54
      %p61 = scmp.eq.s32.totalorder %s23, 1
      %p62 = por %p60, %p61
      %p63 = scmp.ne.s32.totalorder %s54, %s55
      %p64 = scmp.eq.s32.totalorder %s23, 0
      %p65 = por %p63, %p64
      %p66 = scmp.ne.s32.totalorder %s54, %s55
      %p67 = scmp.eq.s32.totalorder %s24, 1
      %p68 = por %p66, %p67
      %p70 = scmp.ne.s32.totalorder %s55, %s69
      %p71 = scmp.eq.s32.totalorder %s24, 0
      %p72 = por %p70, %p71
      %s74 = sadd.s32 %s73, 1
      %p77 = scmp.eq.s32.totalorder %s18, 1
      %p78 = scmp.ne.s32.totalorder %s73, %s75
      %p79 = scmp.eq.s32.totalorder %s18, 0
      %p80 = por %p78, %p79
      %p81 = scmp.ne.s32.totalorder %s73, %s75
      %p82 = scmp.eq.s32.totalorder %s23, 1
      %p83 = por %p81, %p82
      %p84 = scmp.ne.s32.totalorder %s75, %s76
      %p85 = scmp.eq.s32.totalorder %s23, 0
      %p86 = por %p84, %p85
      %p87 = scmp.ne.s32.totalorder %s75, %s76
      %p88 = scmp.eq.s32.totalorder %s24, 1
      %p89 = por %p87, %p88
      %p91 = scmp.ne.s32.totalorder %s76, %s90
      %p92 = scmp.eq.s32.totalorder %s24, 0
      %p93 = por %p91, %p92
      %s95 = sadd.s32 %s94, 1
      %p98 = scmp.eq.s32.totalorder %s18, 1
      %p99 = scmp.ne.s32.totalorder %s94, %s96
      %p100 = scmp.eq.s32.totalorder %s18, 0
      %p101 = por %p99, %p100
      %p102 = scmp.ne.s32.totalorder %s94, %s96
      %p103 = scmp.eq.s32.totalorder %s23, 1
      %p104 = por %p102, %p103
      %p105 = scmp.ne.s32.totalorder %s96, %s97
      %p106 = scmp.eq.s32.totalorder %s23, 0
      %p107 = por %p105, %p106
      %p108 = scmp.ne.s32.totalorder %s96, %s97
      %p109 = scmp.eq.s32.totalorder %s24, 1
      %p110 = por %p108, %p109
      %p112 = scmp.ne.s32.totalorder %s97, %s111
      %p113 = scmp.eq.s32.totalorder %s24, 0
      %p114 = por %p112, %p113
      %s116 = sadd.s32 %s115, 1
      %p119 = scmp.eq.s32.totalorder %s18, 1
      %p120 = scmp.ne.s32.totalorder %s115, %s117
      %p121 = scmp.eq.s32.totalorder %s18, 0
      %p122 = por %p120, %p121
      %p123 = scmp.ne.s32.totalorder %s115, %s117
      %p124 = scmp.eq.s32.totalorder %s23, 1
      %p125 = por %p123, %p124
      %p126 = scmp.ne.s32.totalorder %s117, %s118
      %p127 = scmp.eq.s32.totalorder %s23, 0
      %p128 = por %p126, %p127
      %p129 = scmp.ne.s32.totalorder %s117, %s118
      %p130 = scmp.eq.s32.totalorder %s24, 1
      %p131 = por %p129, %p130
      %p133 = scmp.ne.s32.totalorder %s118, %s132
      %p134 = scmp.eq.s32.totalorder %s24, 0
      %p135 = por %p133, %p134
      %s136 = ssub.s32 %s18, %s25
      %p137 = scmp.eq.s32.totalorder %s136, 0
      %s139 = sadd.s32 %s138, 1
      %s140 = scalar_select %p137, %s138, %s139
      %p143 = pneg %p137
      %p144 = scmp.eq.s32.totalorder %s18, 1
      %p145 = por %p143, %p144
      %p146 = scmp.ne.s32.totalorder %s138, %s141
      %p147 = scmp.eq.s32.totalorder %s18, 0
      %p148 = por %p146, %p147
      %p149 = scmp.ne.s32.totalorder %s138, %s141
      %p150 = scmp.eq.s32.totalorder %s23, 1
      %p151 = por %p149, %p150
      %p152 = scmp.ne.s32.totalorder %s141, %s142
      %p153 = scmp.eq.s32.totalorder %s23, 0
      %p154 = por %p152, %p153
      %p155 = scmp.ne.s32.totalorder %s141, %s142
      %p156 = scmp.eq.s32.totalorder %s24, 1
      %p157 = por %p155, %p156
      %p159 = scmp.ne.s32.totalorder %s142, %s158
      %p160 = scmp.eq.s32.totalorder %s24, 0
      %p161 = por %p159, %p160
      %p162 = scmp.le.s32.totalorder 1, %s18
      %p163 = scmp.lt.s32.totalorder %s18, 3
      %p164 = pnand %p162, %p163
      %p165 = pneg %p164
      // Predicated region
      $region9: #{basic_block_apply.1} parent=5 // pred_check
        _
      $region10: #{basic_block_apply.1} parent=5 // pred_check_branch
        %167 = sbr.rel (%p164) target = $region12
      $region11: #{basic_block_apply.1} parent=5 // pred_region
        %s168 = ssub.s32 %s18, 1
        // Predicated region
        $region13: #{basic_block_apply.1} parent=11 // pred_check
          %p169 = pneg %p65
        $region14: #{basic_block_apply.1} parent=11 // pred_check_branch
          %171 = sbr.rel (%p169) target = $region16
        $region15: #{basic_block_apply.1} parent=11 // pred_region
          %s173 = ssub.s32 3072, 3072
          %174 = vsyncadd [#allocation8], %s173
          %s175 = sshll.u32 [#allocation7], 4
          %s176 = int_to_ptr.vmem [resolvable:$true] %s175
          %181 = dma.hbm_to_vmem [thread:$0]  %s1, 3072, %s176, [#allocation8], 64, 64, 4
        $region16: #{basic_block_apply.1} parent=11 // pred_fallthru
          _
        // Predicated region
        $region17: #{basic_block_apply.1} parent=11 // pred_check
          %p182 = pneg %p86
        $region18: #{basic_block_apply.1} parent=11 // pred_check_branch
          %184 = sbr.rel (%p182) target = $region20
        $region19: #{basic_block_apply.1} parent=11 // pred_region
          _
        $region20: #{basic_block_apply.1} parent=11 // pred_fallthru
          _
        // Predicated region
        $region21: #{basic_block_apply.1} parent=11 // pred_check
          %p185 = pneg %p107
        $region22: #{basic_block_apply.1} parent=11 // pred_check_branch
          %187 = sbr.rel (%p185) target = $region24
        $region23: #{basic_block_apply.1} parent=11 // pred_region
          %s189 = ssub.s32 3072, 3072
          %190 = vsyncadd [#allocation8], %s189
          %s191 = sshll.u32 [#allocation9], 4
          %s192 = int_to_ptr.vmem [resolvable:$true] %s191
          %197 = dma.hbm_to_vmem [thread:$0]  %s3, 3072, %s192, [#allocation8], 64, 64, 4
        $region24: #{basic_block_apply.1} parent=11 // pred_fallthru
          _
        // Predicated region
        $region25: #{basic_block_apply.1} parent=11 // pred_check
          %p198 = pneg %p128
        $region26: #{basic_block_apply.1} parent=11 // pred_check_branch
          %200 = sbr.rel (%p198) target = $region28
        $region27: #{basic_block_apply.1} parent=11 // pred_region
          _
        $region28: #{basic_block_apply.1} parent=11 // pred_fallthru
          _
      $region12: #{basic_block_apply.1} parent=5 // pred_fallthru
        _
      %p201 = scmp.lt.s32.totalorder %s18, 2
      // Predicated region
      $region29: #{basic_block_apply.1} parent=5 // pred_check
        %p202 = pneg %p201
      $region30: #{basic_block_apply.1} parent=5 // pred_check_branch
        %204 = sbr.rel (%p202) target = $region32
      $region31: #{basic_block_apply.1} parent=5 // pred_region
        // Predicated region
        $region33: #{basic_block_apply.1} parent=31 // pred_check
          %p205 = pneg %p38
        $region34: #{basic_block_apply.1} parent=31 // pred_check_branch
          %207 = sbr.rel (%p205) target = $region36
        $region35: #{basic_block_apply.1} parent=31 // pred_region
          %s208 = sand.u32 %s28, 1
          %s209 = scalar_lea.sflag [#allocation5], %s208
          %s210 = sand.u32 %s28, 1
          %s211 = smul.addr %s210, 32
          %s212 = scalar_lea.vmem [#allocation4], %s211
          %s213 = smul.u32 2, %s18
          %s215 = ssub.s32 512, 512
          %216 = vsyncadd %s209, %s215
          %s217 = smul.addr %s213, 2
          %s218 = smul.addr %s217, 128
          %s219 = scalar_lea.hbm %s0, %s218
          %s220 = sshll.u32 %s212, 4
          %s221 = int_to_ptr.vmem [resolvable:$true] %s220
          %226 = dma.hbm_to_vmem [thread:$0]  %s219, 512, %s221, %s209, 128, 128, 8
        $region36: #{basic_block_apply.1} parent=31 // pred_fallthru
          _
      $region32: #{basic_block_apply.1} parent=5 // pred_fallthru
        _
      %p227 = scmp.le.s32.totalorder 1, %s18
      %p228 = scmp.lt.s32.totalorder %s18, 3
      %p229 = pnand %p227, %p228
      %p230 = pneg %p229
      // Predicated region
      $region37: #{basic_block_apply.1} parent=5 // pred_check
        _
      $region38: #{basic_block_apply.1} parent=5 // pred_check_branch
        %232 = sbr.rel (%p229) target = $region40
      $region39: #{basic_block_apply.1} parent=5 // pred_region
        %s233 = ssub.s32 %s18, 1
        %s234 = sand.u32 %s31, 1
        %s235 = scalar_lea.sflag [#allocation5], %s234
        %s236 = sand.u32 %s31, 1
        %s237 = smul.addr %s236, 32
        %s238 = scalar_lea.vmem [#allocation4], %s237
        // Predicated region
        $region41: #{basic_block_apply.1} parent=39 // pred_check
          %p239 = pneg %p44
        $region42: #{basic_block_apply.1} parent=39 // pred_check_branch
          %241 = sbr.rel (%p239) target = $region44
        $region43: #{basic_block_apply.1} parent=39 // pred_region
          %242 = dma.done %s235, 512
        $region44: #{basic_block_apply.1} parent=39 // pred_fallthru
          _
        // Predicated region
        $region45: #{basic_block_apply.1} parent=39 // pred_check
          %p243 = pneg %p65
        $region46: #{basic_block_apply.1} parent=39 // pred_check_branch
          %245 = sbr.rel (%p243) target = $region48
        $region47: #{basic_block_apply.1} parent=39 // pred_region
          %246 = dma.done [#allocation8], 3072
        $region48: #{basic_block_apply.1} parent=39 // pred_fallthru
          _
        // Predicated region
        $region49: #{basic_block_apply.1} parent=39 // pred_check
          %p247 = pneg %p107
        $region50: #{basic_block_apply.1} parent=39 // pred_check_branch
          %249 = sbr.rel (%p247) target = $region52
        $region51: #{basic_block_apply.1} parent=39 // pred_region
          %250 = dma.done [#allocation8], 3072
        $region52: #{basic_block_apply.1} parent=39 // pred_fallthru
          _
        %s251 = sand.u32 %s31, 1
        %s252 = scalar_lea.sflag [#allocation5], %s251
        %s253 = sand.u32 %s31, 1
        %s254 = smul.addr %s253, 32
        %s255 = scalar_lea.vmem [#allocation4], %s254
        %p256 = pneg %p44
        %p257 = pneg %p41
        %p258 = pneg %p65
        %p259 = pneg %p62
        %p260 = pneg %p86
        %p261 = pneg %p83
        %p262 = pneg %p107
        %p263 = pneg %p104
        %p264 = pneg %p128
        %p265 = pneg %p125
        %p266 = pneg %p154
        %p267 = pneg %p151
        %s268 = sand.u32 %s141, 1
        %s269 = scalar_lea.sflag [#allocation6], %s268
        %s270 = sand.u32 %s141, 1
        %s271 = smul.addr %s270, 32
        %s272 = scalar_lea.vmem [#allocation10], %s271
        %s273 = smul.u32 2, %s23
        %s274 = smul.u32 2, %s23
        %p276 = scmp.eq.s32.totalorder %s23, 0
        // Predicated region
        $region53: #{basic_block_apply.1} parent=39 // pred_check
          %p277 = pneg %p276
        $region54: #{basic_block_apply.1} parent=39 // pred_check_branch
          %279 = sbr.rel (%p277) target = $region56
        $region55: #{basic_block_apply.1} parent=39 // pred_region
          %vm280 = vcmask 1040384
          %vm281 = vsmask.f32 256
          %vm282 = vmand %vm280, %vm281
          %v283 = vld [vmem:[#allocation2] sm:$0x1]
          %v284 = vsel %vm282, 0, %v283
          %285 = vst [vmem:[#allocation2] sm:$0x1] %v284
          %vm286 = vsmask.f32 7938
          %vm287 = vmand %vm280, %vm286
          %v288 = vld [vmem:[#allocation2 + $0x8] sm:$0x1]
          %v289 = vsel %vm287, 0, %v288
          %290 = vst [vmem:[#allocation2 + $0x8] sm:$0x1] %v289
          %v291 = vld [vmem:[#allocation3] sm:$0x1]
          %v292 = vsel %vm282, 0, %v291
          %293 = vst [vmem:[#allocation3] sm:$0x1] %v292
          %v294 = vld [vmem:[#allocation3 + $0x8] sm:$0x1]
          %v295 = vsel %vm287, 0, %v294
          %296 = vst [vmem:[#allocation3 + $0x8] sm:$0x1] %v295
          %vm297 = vcmask 1041409
          %vm298 = vsmask.f32 1280
          %vm299 = vmand %vm297, %vm298
          %v300 = vld [vmem:[#allocation2 + $0x8] sm:$0x2]
          %v301 = vsel %vm299, 0, %v300
          %302 = vst [vmem:[#allocation2 + $0x8] sm:$0x2] %v301
          %vm303 = vsmask.f32 7942
          %vm304 = vmand %vm297, %vm303
          %v305 = vld [vmem:[#allocation2 + $0x10] sm:$0x2]
          %v306 = vsel %vm304, 0, %v305
          %307 = vst [vmem:[#allocation2 + $0x10] sm:$0x2] %v306
          %v308 = vld [vmem:[#allocation3 + $0x8] sm:$0x2]
          %v309 = vsel %vm299, 0, %v308
          %310 = vst [vmem:[#allocation3 + $0x8] sm:$0x2] %v309
          %v311 = vld [vmem:[#allocation3 + $0x10] sm:$0x2]
          %v312 = vsel %vm304, 0, %v311
          %313 = vst [vmem:[#allocation3 + $0x10] sm:$0x2] %v312
        $region56: #{basic_block_apply.1} parent=39 // pred_fallthru
          _
        %v314 = vld [vmem:[%s238] sm:$0xff]
        %v315 = vld [vmem:[%s238 + $0x8] sm:$0xff]
        %v316 = vpack.c.bf16 %v315, %v314
        %v318 = vunpack.c.l.b16 %v316
        %v319 = vunpack.c.h.b16 %v316
        %v320 = vpack.c.b16 %v318, %v318
        %v321 = vpack.c.b16 %v319, %v319
        %vm322 = vsmask.f32 256
        %vm323 = vsmask.f32 4368
        %vm324 = vmor %vm322, %vm323
        %v326 = vshrl.u32 %v320, 16
        %v328 = vrot.slane %v326, 7
        %v329 = vshll.u32 %v320, 16
        %v331 = vor.u32 %v328, %v329
        %v332 = vrot.slane %v328, 4
        %v334 = vshrl.u32 %v321, 16
        %v336 = vrot.slane %v334, 7
        %v337 = vshll.u32 %v321, 16
        %v339 = vor.u32 %v336, %v337
        %v340 = vsel %vm324, %v332, %v339
        %v341 = vrot.slane %v336, 4
        %vm345 = vcmask 1043456
        %vm346 = vsmask.f32 7938
        %vm347 = vmand %vm345, %vm346
        %v348 = vld [vmem:[#allocation2] sm:$0xf]
        %v349 = vsel %vm347, %v331, %v348
        %350 = vst [vmem:[#allocation2] sm:$0xf] %v349
        %351 = vst [vmem:[#allocation2 + $0x4] sm:$0xf] %v340
        %vm352 = vcmask 1040384
        %vm353 = vmand %vm352, %vm322
        %v354 = vld [vmem:[#allocation2 + $0x8] sm:$0x1]
        %v355 = vsel %vm353, %v341, %v354
        %356 = vst [vmem:[#allocation2 + $0x8] sm:$0x1] %v355
        %s357 = scalar_lea.vmem %s238, 16 [#allocation4]
        %v358 = vld [vmem:[%s357] sm:$0xff]
        %v359 = vld [vmem:[%s357 + $0x8] sm:$0xff]
        %v360 = vpack.c.bf16 %v359, %v358
        %v362 = vunpack.c.l.b16 %v360
        %v363 = vunpack.c.h.b16 %v360
        %v364 = vpack.c.b16 %v362, %v362
        %v365 = vpack.c.b16 %v363, %v363
        %vm366 = vsmask.f32 1280
        %vm367 = vsmask.f32 5392
        %vm368 = vmor %vm366, %vm367
        %v370 = vshrl.u32 %v364, 16
        %v372 = vrot.slane %v370, 6
        %v373 = vshll.u32 %v364, 16
        %v375 = vrot.slane %v373, 7
        %v376 = vor.u32 %v372, %v375
        %v377 = vrot.slane %v376, 4
        %v379 = vshrl.u32 %v365, 16
        %v381 = vrot.slane %v379, 6
        %v382 = vshll.u32 %v365, 16
        %v384 = vrot.slane %v382, 7
        %v385 = vor.u32 %v381, %v384
        %v386 = vsel %vm368, %v377, %v385
        %v387 = vrot.slane %v385, 4
        %vm391 = vcmask 1043457
        %vm392 = vsmask.f32 7942
        %vm393 = vmand %vm391, %vm392
        %v394 = vld [vmem:[#allocation2 + $0x8] sm:$0xe]
        %v395 = vsel %vm393, %v376, %v394
        %396 = vst [vmem:[#allocation2 + $0x8] sm:$0xe] %v395
        %397 = vst [vmem:[#allocation2 + $0xc] sm:$0xf] %v386
        %vm398 = vcmask 1041408
        %vm399 = vmand %vm398, %vm366
        %v400 = vld [vmem:[#allocation2 + $0x10] sm:$0x3]
        %v401 = vsel %vm399, %v387, %v400
        %402 = vst [vmem:[#allocation2 + $0x10] sm:$0x3] %v401
        %v403 = vld [vmem:[#allocation2] sm:$0xf]
        %v404 = vld [vmem:[#allocation2 + $0x4] sm:$0xf]
        %v405 = vld [vmem:[#allocation2 + $0x8] sm:$0xf]
        %v406 = vld [vmem:[#allocation2 + $0xc] sm:$0xf]
        %v407 = vld [vmem:[#allocation2 + $0x10] sm:$0x1]
        %v408 = vld [vmem:[#allocation7] sm:$0xf]
        %v409 = vld [vmem:[#allocation7 + $0x4] sm:$0xf]
        %v410 = vld [vmem:[#allocation7 + $0x8] sm:$0xf]
        %v411 = vld [vmem:[#allocation7 + $0xc] sm:$0xf]
        %v412 = vld [vmem:[#allocation7 + $0x10] sm:$0xf]
        %v413 = vld [vmem:[#allocation7 + $0x14] sm:$0xf]
        %v414 = vld [vmem:[#allocation7 + $0x18] sm:$0xf]
        %v415 = vld [vmem:[#allocation7 + $0x1c] sm:$0xf]
        %v416 = vld [vmem:[#allocation7 + $0x20] sm:$0xf]
        %v417 = vld [vmem:[#allocation7 + $0x24] sm:$0xf]
        %v418 = vld [vmem:[#allocation7 + $0x28] sm:$0xf]
        %v419 = vld [vmem:[#allocation7 + $0x2c] sm:$0xf]
        %v420 = vld [vmem:[#allocation7 + $0x30] sm:$0xf]
        %v421 = vld [vmem:[#allocation7 + $0x34] sm:$0xf]
        %v422 = vld [vmem:[#allocation7 + $0x38] sm:$0xf]
        %v423 = vld [vmem:[#allocation7 + $0x3c] sm:$0xf]
        %v424 = vld [vmem:[#allocation2 + $0x10] sm:$0x3]
        %s425 = scalar_lea.vmem [#allocation7], 64
        %v426 = vld [vmem:[%s425] sm:$0xf]
        %v427 = vld [vmem:[%s425 + $0x4] sm:$0xf]
        %v428 = vld [vmem:[%s425 + $0x8] sm:$0xf]
        %v429 = vld [vmem:[%s425 + $0xc] sm:$0xf]
        %v430 = vld [vmem:[%s425 + $0x10] sm:$0xf]
        %v431 = vld [vmem:[%s425 + $0x14] sm:$0xf]
        %v432 = vld [vmem:[%s425 + $0x18] sm:$0xf]
        %v433 = vld [vmem:[%s425 + $0x1c] sm:$0xf]
        %v434 = vld [vmem:[%s425 + $0x20] sm:$0xf]
        %v435 = vld [vmem:[%s425 + $0x24] sm:$0xf]
        %v436 = vld [vmem:[%s425 + $0x28] sm:$0xf]
        %v437 = vld [vmem:[%s425 + $0x2c] sm:$0xf]
        %v438 = vld [vmem:[%s425 + $0x30] sm:$0xf]
        %v439 = vld [vmem:[%s425 + $0x34] sm:$0xf]
        %v440 = vld [vmem:[%s425 + $0x38] sm:$0xf]
        %v441 = vld [vmem:[%s425 + $0x3c] sm:$0xf]
        %v447 = vunpack.c.l.b16 %v403
        %v448 = vunpack.c.l.b16 %v404
        %v449 = vunpack.c.l.b16 %v405
        %v450 = vunpack.c.l.b16 %v406
        %v451 = vunpack.c.l.b16 %v424
        %v452 = vpack.c.b16 %v448, %v447
        %v453 = vpack.c.b16 %v450, %v449
        %v454 = vpack.c.b16 %v451, %v451
        %vm455 = vsmask.f32 7424
        %v457 = vshrl.u32 %v452, 16
        %v459 = vshll.u32 %v452, 16
        %v461 = vrot.slane %v459, 1
        %v462 = vor.u32 %v457, %v461
        %v464 = vshll.u32 %v453, 16
        %v466 = vrot.slane %v464, 1
        %v467 = vsel %vm455, %v462, %v466
        %v468 = vshrl.u32 %v453, 16
        %v470 = vor.u32 %v468, %v466
        %v472 = vshll.u32 %v454, 16
        %v474 = vrot.slane %v472, 1
        %v475 = vsel %vm455, %v470, %v474
        %v476 = vshrl.u32 %v454, 16
        %v478 = vor.u32 %v476, %v474
        %v498 = vunpack.c.l.b16 %v426
        %v499 = vunpack.c.l.b16 %v427
        %v500 = vunpack.c.l.b16 %v428
        %v501 = vunpack.c.l.b16 %v429
        %v502 = vunpack.c.l.b16 %v430
        %v503 = vunpack.c.l.b16 %v431
        %v504 = vunpack.c.l.b16 %v432
        %v505 = vunpack.c.l.b16 %v433
        %v506 = vunpack.c.l.b16 %v434
        %v507 = vunpack.c.l.b16 %v435
        %v508 = vunpack.c.l.b16 %v436
        %v509 = vunpack.c.l.b16 %v437
        %v510 = vunpack.c.l.b16 %v438
        %v511 = vunpack.c.l.b16 %v439
        %v512 = vunpack.c.l.b16 %v440
        %v513 = vunpack.c.l.b16 %v441
        %v514 = vpack.c.b16 %v499, %v498
        %v515 = vpack.c.b16 %v501, %v500
        %v516 = vpack.c.b16 %v503, %v502
        %v517 = vpack.c.b16 %v505, %v504
        %v518 = vpack.c.b16 %v507, %v506
        %v519 = vpack.c.b16 %v509, %v508
        %v520 = vpack.c.b16 %v511, %v510
        %v521 = vpack.c.b16 %v513, %v512
        %530 = vmatprep.subr.bf16.mxu0 0
        %531 = vmatpush1.bf16.msra.mxu0 %v514
        %532 = vmatprep.subr.bf16.mxu0 0
        %533 = vmatpush1.bf16.msra.mxu0 %v515
        %534 = vmatprep.subr.bf16.mxu0 0
        %535 = vmatpush1.bf16.msra.mxu0 %v516
        %536 = vmatprep.subr.bf16.mxu0 0
        %537 = vmatpush1.bf16.msra.mxu0 %v517
        %538 = vmatprep.subr.bf16.mxu0 0
        %539 = vmatpush1.bf16.msra.mxu0 %v518
        %540 = vmatprep.subr.bf16.mxu0 0
        %541 = vmatpush1.bf16.msra.mxu0 %v519
        %542 = vmatprep.subr.bf16.mxu0 0
        %543 = vmatpush1.bf16.msra.mxu0 %v520
        %544 = vmatprep.subr.bf16.mxu0 0
        %545 = vmatpush1.bf16.msra.mxu0 %v521
        %546 = vmatprep.subr.bf16.mxu0 0
        %547 = vmatpush1.bf16.msra.mxu0 0
        %548 = vmatprep.subr.bf16.mxu0 0
        %549 = vmatpush1.bf16.msra.mxu0 0
        %550 = vmatprep.subr.bf16.mxu0 0
        %551 = vmatpush1.bf16.msra.mxu0 0
        %552 = vmatprep.subr.bf16.mxu0 0
        %553 = vmatpush1.bf16.msra.mxu0 0
        %554 = vmatprep.subr.bf16.mxu0 0
        %555 = vmatpush1.bf16.msra.mxu0 0
        %556 = vmatprep.subr.bf16.mxu0 0
        %557 = vmatpush1.bf16.msra.mxu0 0
        %558 = vmatprep.subr.bf16.mxu0 0
        %559 = vmatpush1.bf16.msra.mxu0 0
        %560 = vmatprep.subr.bf16.mxu0 0
        %561 = vmatpush1.bf16.msra.mxu0 0
        %562 = vmatprep.mubr.bf16.mxu0 0
        %563 = vmatmul.mubr.bf16.gmra.mrb[0].mxu0 %v467
        %v564 = vpop.f32.mrb[0].mxu0
        %v565 = vadd.f32 0.0, %v564
        %v566 = vpop.f32.mrb[0].mxu0
        %v567 = vpop.f32.mrb[0].mxu0
        %v568 = vadd.f32 0.0, %v567
        %v569 = vpop.f32.mrb[0].mxu0
        %570 = vmatprep.mubr.bf16.mxu0 0
        %571 = vmatmul.mubr.bf16.gmra.mrb[0].mxu0 %v475
        %v572 = vpop.f32.mrb[0].mxu0
        %v573 = vadd.f32 0.0, %v572
        %v574 = vpop.f32.mrb[0].mxu0
        %v575 = vpop.f32.mrb[0].mxu0
        %v576 = vadd.f32 0.0, %v575
        %v577 = vpop.f32.mrb[0].mxu0
        %578 = vmatprep.mubr.bf16.mxu0 0
        %579 = vmatmul.mubr.bf16.gmra.mrb[0].mxu0 %v478
        %v580 = vpop.f32.mrb[0].mxu0
        %v581 = vadd.f32 0.0, %v580
        %v582 = vpop.f32.mrb[0].mxu0
        %v583 = vpop.f32.mrb[0].mxu0
        %v584 = vpop.f32.mrb[0].mxu0
        %585 = vdwg.mxu0
        %v587 = vunpack.c.l.b16 %v407
        %v588 = vpack.c.b16 %v587, %v587
        %v608 = vunpack.c.l.b16 %v408
        %v609 = vunpack.c.l.b16 %v409
        %v610 = vunpack.c.l.b16 %v410
        %v611 = vunpack.c.l.b16 %v411
        %v612 = vunpack.c.l.b16 %v412
        %v613 = vunpack.c.l.b16 %v413
        %v614 = vunpack.c.l.b16 %v414
        %v615 = vunpack.c.l.b16 %v415
        %v616 = vunpack.c.l.b16 %v416
        %v617 = vunpack.c.l.b16 %v417
        %v618 = vunpack.c.l.b16 %v418
        %v619 = vunpack.c.l.b16 %v419
        %v620 = vunpack.c.l.b16 %v420
        %v621 = vunpack.c.l.b16 %v421
        %v622 = vunpack.c.l.b16 %v422
        %v623 = vunpack.c.l.b16 %v423
        %v624 = vpack.c.b16 %v609, %v608
        %v625 = vpack.c.b16 %v611, %v610
        %v626 = vpack.c.b16 %v613, %v612
        %v627 = vpack.c.b16 %v615, %v614
        %v628 = vpack.c.b16 %v617, %v616
        %v629 = vpack.c.b16 %v619, %v618
        %v630 = vpack.c.b16 %v621, %v620
        %v631 = vpack.c.b16 %v623, %v622
        %640 = vmatprep.subr.bf16.mxu0 0
        %641 = vmatpush1.bf16.msra.mxu0 %v624
        %642 = vmatprep.subr.bf16.mxu0 0
        %643 = vmatpush1.bf16.msra.mxu0 %v625
        %644 = vmatprep.subr.bf16.mxu0 0
        %645 = vmatpush1.bf16.msra.mxu0 %v626
        %646 = vmatprep.subr.bf16.mxu0 0
        %647 = vmatpush1.bf16.msra.mxu0 %v627
        %648 = vmatprep.subr.bf16.mxu0 0
        %649 = vmatpush1.bf16.msra.mxu0 %v628
        %650 = vmatprep.subr.bf16.mxu0 0
        %651 = vmatpush1.bf16.msra.mxu0 %v629
        %652 = vmatprep.subr.bf16.mxu0 0
        %653 = vmatpush1.bf16.msra.mxu0 %v630
        %654 = vmatprep.subr.bf16.mxu0 0
        %655 = vmatpush1.bf16.msra.mxu0 %v631
        %656 = vmatprep.subr.bf16.mxu0 0
        %657 = vmatpush1.bf16.msra.mxu0 0
        %658 = vmatprep.subr.bf16.mxu0 0
        %659 = vmatpush1.bf16.msra.mxu0 0
        %660 = vmatprep.subr.bf16.mxu0 0
        %661 = vmatpush1.bf16.msra.mxu0 0
        %662 = vmatprep.subr.bf16.mxu0 0
        %663 = vmatpush1.bf16.msra.mxu0 0
        %664 = vmatprep.subr.bf16.mxu0 0
        %665 = vmatpush1.bf16.msra.mxu0 0
        %666 = vmatprep.subr.bf16.mxu0 0
        %667 = vmatpush1.bf16.msra.mxu0 0
        %668 = vmatprep.subr.bf16.mxu0 0
        %669 = vmatpush1.bf16.msra.mxu0 0
        %670 = vmatprep.subr.bf16.mxu0 0
        %671 = vmatpush1.bf16.msra.mxu0 0
        %672 = vmatprep.mubr.bf16.mxu0 0
        %673 = vmatmul.mubr.bf16.gmra.mrb[0].mxu0 %v452
        %v674 = vpop.f32.mrb[0].mxu0
        %v675 = vadd.f32 %v565, %v674
        %v676 = vpop.f32.mrb[0].mxu0
        %v677 = vpop.f32.mrb[0].mxu0
        %v678 = vadd.f32 %v568, %v677
        %v679 = vpop.f32.mrb[0].mxu0
        %680 = vmatprep.mubr.bf16.mxu0 0
        %681 = vmatmul.mubr.bf16.gmra.mrb[0].mxu0 %v453
        %v682 = vpop.f32.mrb[0].mxu0
        %v683 = vadd.f32 %v573, %v682
        %v684 = vpop.f32.mrb[0].mxu0
        %v685 = vpop.f32.mrb[0].mxu0
        %v686 = vadd.f32 %v576, %v685
        %v687 = vpop.f32.mrb[0].mxu0
        %688 = vmatprep.mubr.bf16.mxu0 0
        %689 = vmatmul.mubr.bf16.gmra.mrb[0].mxu0 %v588
        %v690 = vpop.f32.mrb[0].mxu0
        %v691 = vadd.f32 %v581, %v690
        %v692 = vpop.f32.mrb[0].mxu0
        %v693 = vpop.f32.mrb[0].mxu0
        %v694 = vpop.f32.mrb[0].mxu0
        %695 = vdwg.mxu0
        %v696 = vld [vmem:[#allocation2] sm:$0xe]
        %s697 = scalar_lea.vmem [#allocation7], 128
        %v698 = vld [vmem:[%s697] sm:$0xf]
        %v699 = vld [vmem:[%s697 + $0x4] sm:$0xf]
        %v700 = vld [vmem:[%s697 + $0x8] sm:$0xf]
        %v701 = vld [vmem:[%s697 + $0xc] sm:$0xf]
        %v702 = vld [vmem:[%s697 + $0x10] sm:$0xf]
        %v703 = vld [vmem:[%s697 + $0x14] sm:$0xf]
        %v704 = vld [vmem:[%s697 + $0x18] sm:$0xf]
        %v705 = vld [vmem:[%s697 + $0x1c] sm:$0xf]
        %v706 = vld [vmem:[%s697 + $0x20] sm:$0xf]
        %v707 = vld [vmem:[%s697 + $0x24] sm:$0xf]
        %v708 = vld [vmem:[%s697 + $0x28] sm:$0xf]
        %v709 = vld [vmem:[%s697 + $0x2c] sm:$0xf]
        %v710 = vld [vmem:[%s697 + $0x30] sm:$0xf]
        %v711 = vld [vmem:[%s697 + $0x34] sm:$0xf]
        %v712 = vld [vmem:[%s697 + $0x38] sm:$0xf]
        %v713 = vld [vmem:[%s697 + $0x3c] sm:$0xf]
        %v715 = vunpack.c.l.b16 %v696
        %v716 = vpack.c.b16 %v448, %v715
        %vm717 = vcmask 1046528
        %v718 = vrot.slane %v716, 1
        %v719 = vrot.slane %v453, 1
        %v720 = vsel %vm717, %v718, %v719
        %v721 = vrot.slane %v454, 1
        %v722 = vsel %vm717, %v719, %v721
        %v742 = vunpack.c.l.b16 %v698
        %v743 = vunpack.c.l.b16 %v699
        %v744 = vunpack.c.l.b16 %v700
        %v745 = vunpack.c.l.b16 %v701
        %v746 = vunpack.c.l.b16 %v702
        %v747 = vunpack.c.l.b16 %v703
        %v748 = vunpack.c.l.b16 %v704
        %v749 = vunpack.c.l.b16 %v705
        %v750 = vunpack.c.l.b16 %v706
        %v751 = vunpack.c.l.b16 %v707
        %v752 = vunpack.c.l.b16 %v708
        %v753 = vunpack.c.l.b16 %v709
        %v754 = vunpack.c.l.b16 %v710
        %v755 = vunpack.c.l.b16 %v711
        %v756 = vunpack.c.l.b16 %v712
        %v757 = vunpack.c.l.b16 %v713
        %v758 = vpack.c.b16 %v743, %v742
        %v759 = vpack.c.b16 %v745, %v744
        %v760 = vpack.c.b16 %v747, %v746
        %v761 = vpack.c.b16 %v749, %v748
        %v762 = vpack.c.b16 %v751, %v750
        %v763 = vpack.c.b16 %v753, %v752
        %v764 = vpack.c.b16 %v755, %v754
        %v765 = vpack.c.b16 %v757, %v756
        %774 = vmatprep.subr.bf16.mxu0 0
        %775 = vmatpush1.bf16.msra.mxu0 %v758
        %776 = vmatprep.subr.bf16.mxu0 0
        %777 = vmatpush1.bf16.msra.mxu0 %v759
        %778 = vmatprep.subr.bf16.mxu0 0
        %779 = vmatpush1.bf16.msra.mxu0 %v760
        %780 = vmatprep.subr.bf16.mxu0 0
        %781 = vmatpush1.bf16.msra.mxu0 %v761
        %782 = vmatprep.subr.bf16.mxu0 0
        %783 = vmatpush1.bf16.msra.mxu0 %v762
        %784 = vmatprep.subr.bf16.mxu0 0
        %785 = vmatpush1.bf16.msra.mxu0 %v763
        %786 = vmatprep.subr.bf16.mxu0 0
        %787 = vmatpush1.bf16.msra.mxu0 %v764
        %788 = vmatprep.subr.bf16.mxu0 0
        %789 = vmatpush1.bf16.msra.mxu0 %v765
        %790 = vmatprep.subr.bf16.mxu0 0
        %791 = vmatpush1.bf16.msra.mxu0 0
        %792 = vmatprep.subr.bf16.mxu0 0
        %793 = vmatpush1.bf16.msra.mxu0 0
        %794 = vmatprep.subr.bf16.mxu0 0
        %795 = vmatpush1.bf16.msra.mxu0 0
        %796 = vmatprep.subr.bf16.mxu0 0
        %797 = vmatpush1.bf16.msra.mxu0 0
        %798 = vmatprep.subr.bf16.mxu0 0
        %799 = vmatpush1.bf16.msra.mxu0 0
        %800 = vmatprep.subr.bf16.mxu0 0
        %801 = vmatpush1.bf16.msra.mxu0 0
        %802 = vmatprep.subr.bf16.mxu0 0
        %803 = vmatpush1.bf16.msra.mxu0 0
        %804 = vmatprep.subr.bf16.mxu0 0
        %805 = vmatpush1.bf16.msra.mxu0 0
        %806 = vmatprep.mubr.bf16.mxu0 0
        %807 = vmatmul.mubr.bf16.gmra.mrb[0].mxu0 %v720
        %v808 = vpop.f32.mrb[0].mxu0
        %v809 = vadd.f32 0.0, %v808
        %v810 = vpop.f32.mrb[0].mxu0
        %v811 = vpop.f32.mrb[0].mxu0
        %v812 = vadd.f32 0.0, %v811
        %v813 = vpop.f32.mrb[0].mxu0
        %814 = vmatprep.mubr.bf16.mxu0 0
        %815 = vmatmul.mubr.bf16.gmra.mrb[0].mxu0 %v722
        %v816 = vpop.f32.mrb[0].mxu0
        %v817 = vadd.f32 0.0, %v816
        %v818 = vpop.f32.mrb[0].mxu0
        %v819 = vpop.f32.mrb[0].mxu0
        %v820 = vadd.f32 0.0, %v819
        %v821 = vpop.f32.mrb[0].mxu0
        %822 = vmatprep.mubr.bf16.mxu0 0
        %823 = vmatmul.mubr.bf16.gmra.mrb[0].mxu0 %v721
        %v824 = vpop.f32.mrb[0].mxu0
        %v825 = vadd.f32 0.0, %v824
        %v826 = vpop.f32.mrb[0].mxu0
        %v827 = vpop.f32.mrb[0].mxu0
        %v828 = vpop.f32.mrb[0].mxu0
        %829 = vdwg.mxu0
        %v830 = vadd.f32 %v675, %v809
        %v831 = vadd.f32 %v678, %v812
        %v832 = vadd.f32 %v683, %v817
        %v833 = vadd.f32 %v686, %v820
        %v834 = vadd.f32 %v691, %v825
        %v835 = vld [vmem:[%s2] sm:$0x1]
        %v837 = vlaneseq
        %v838 = vshrl.u32 %v837, 7
        %v839 = vsub.s32 0, %v838
        %v840 = vrot.slane %v835, %v839
        %v842 = vadd.f32 %v830, %v840
        %v843 = vadd.f32 %v831, %v840
        %v844 = vmax.f32 %v842, 0.0
        %v845 = vmax.f32 %v843, 0.0
        %v846 = vpack.c.bf16 %v845, %v844
        %v848 = vunpack.c.l.b16 %v846
        %v849 = vunpack.c.h.b16 %v846
        %v850 = vpack.c.b16 %v848, %v848
        %v851 = vpack.c.b16 %v849, %v849
        %v853 = vshrl.u32 %v850, 16
        %v855 = vrot.slane %v853, 7
        %v856 = vshll.u32 %v850, 16
        %v858 = vor.u32 %v855, %v856
        %v859 = vrot.slane %v855, 4
        %v861 = vshrl.u32 %v851, 16
        %v863 = vrot.slane %v861, 7
        %v864 = vshll.u32 %v851, 16
        %v866 = vor.u32 %v863, %v864
        %v867 = vsel %vm324, %v859, %v866
        %v868 = vrot.slane %v863, 4
        %v872 = vld [vmem:[#allocation3] sm:$0xf]
        %v873 = vsel %vm347, %v858, %v872
        %874 = vst [vmem:[#allocation3] sm:$0xf] %v873
        %875 = vst [vmem:[#allocation3 + $0x4] sm:$0xf] %v867
        %v876 = vld [vmem:[#allocation3 + $0x8] sm:$0x1]
        %v877 = vsel %vm353, %v868, %v876
        %878 = vst [vmem:[#allocation3 + $0x8] sm:$0x1] %v877
        %v879 = vld [vmem:[%s2] sm:$0x1]
        %v881 = vlaneseq
        %v882 = vshrl.u32 %v881, 7
        %v883 = vsub.s32 0, %v882
        %v884 = vrot.slane %v879, %v883
        %v886 = vadd.f32 %v832, %v884
        %v887 = vadd.f32 %v833, %v884
        %v888 = vadd.f32 %v834, %v884
        %v889 = vmax.f32 %v886, 0.0
        %v890 = vmax.f32 %v887, 0.0
        %v891 = vmax.f32 %v888, 0.0
        %v892 = vpack.c.bf16 %v890, %v889
        %v893 = vpack.c.bf16 %v891, %v891
        %v896 = vunpack.c.l.b16 %v892
        %v897 = vunpack.c.h.b16 %v892
        %v898 = vunpack.c.l.b16 %v893
        %v899 = vpack.c.b16 %v896, %v896
        %v900 = vpack.c.b16 %v897, %v897
        %v901 = vpack.c.b16 %v898, %v898
        %v903 = vshrl.u32 %v899, 16
        %v905 = vrot.slane %v903, 7
        %v906 = vshll.u32 %v899, 16
        %v908 = vor.u32 %v905, %v906
        %v909 = vrot.slane %v905, 4
        %v911 = vshrl.u32 %v900, 16
        %v913 = vrot.slane %v911, 7
        %v914 = vshll.u32 %v900, 16
        %v916 = vor.u32 %v913, %v914
        %v917 = vsel %vm324, %v909, %v916
        %v918 = vrot.slane %v913, 4
        %v920 = vshrl.u32 %v901, 16
        %v922 = vrot.slane %v920, 7
        %v923 = vshll.u32 %v901, 16
        %v925 = vor.u32 %v922, %v923
        %v926 = vsel %vm324, %v918, %v925
        %v930 = vld [vmem:[#allocation3 + $0x8] sm:$0xe]
        %v931 = vsel %vm393, %v908, %v930
        %932 = vst [vmem:[#allocation3 + $0x8] sm:$0xe] %v931
        %933 = vst [vmem:[#allocation3 + $0xc] sm:$0xf] %v917
        %v934 = vld [vmem:[#allocation3 + $0x10] sm:$0x3]
        %v935 = vsel %vm399, %v926, %v934
        %936 = vst [vmem:[#allocation3 + $0x10] sm:$0x3] %v935
        %v937 = vld [vmem:[#allocation3] sm:$0xf]
        %v938 = vld [vmem:[#allocation3 + $0x4] sm:$0xf]
        %v939 = vld [vmem:[#allocation3 + $0x8] sm:$0xf]
        %v940 = vld [vmem:[#allocation3 + $0xc] sm:$0xf]
        %v941 = vld [vmem:[#allocation3 + $0x10] sm:$0x1]
        %v942 = vld [vmem:[#allocation9] sm:$0xf]
        %v943 = vld [vmem:[#allocation9 + $0x4] sm:$0xf]
        %v944 = vld [vmem:[#allocation9 + $0x8] sm:$0xf]
        %v945 = vld [vmem:[#allocation9 + $0xc] sm:$0xf]
        %v946 = vld [vmem:[#allocation9 + $0x10] sm:$0xf]
        %v947 = vld [vmem:[#allocation9 + $0x14] sm:$0xf]
        %v948 = vld [vmem:[#allocation9 + $0x18] sm:$0xf]
        %v949 = vld [vmem:[#allocation9 + $0x1c] sm:$0xf]
        %v950 = vld [vmem:[#allocation9 + $0x20] sm:$0xf]
        %v951 = vld [vmem:[#allocation9 + $0x24] sm:$0xf]
        %v952 = vld [vmem:[#allocation9 + $0x28] sm:$0xf]
        %v953 = vld [vmem:[#allocation9 + $0x2c] sm:$0xf]
        %v954 = vld [vmem:[#allocation9 + $0x30] sm:$0xf]
        %v955 = vld [vmem:[#allocation9 + $0x34] sm:$0xf]
        %v956 = vld [vmem:[#allocation9 + $0x38] sm:$0xf]
        %v957 = vld [vmem:[#allocation9 + $0x3c] sm:$0xf]
        %v958 = vld [vmem:[#allocation3 + $0x10] sm:$0x3]
        %s959 = scalar_lea.vmem [#allocation9], 64
        %v960 = vld [vmem:[%s959] sm:$0xf]
        %v961 = vld [vmem:[%s959 + $0x4] sm:$0xf]
        %v962 = vld [vmem:[%s959 + $0x8] sm:$0xf]
        %v963 = vld [vmem:[%s959 + $0xc] sm:$0xf]
        %v964 = vld [vmem:[%s959 + $0x10] sm:$0xf]
        %v965 = vld [vmem:[%s959 + $0x14] sm:$0xf]
        %v966 = vld [vmem:[%s959 + $0x18] sm:$0xf]
        %v967 = vld [vmem:[%s959 + $0x1c] sm:$0xf]
        %v968 = vld [vmem:[%s959 + $0x20] sm:$0xf]
        %v969 = vld [vmem:[%s959 + $0x24] sm:$0xf]
        %v970 = vld [vmem:[%s959 + $0x28] sm:$0xf]
        %v971 = vld [vmem:[%s959 + $0x2c] sm:$0xf]
        %v972 = vld [vmem:[%s959 + $0x30] sm:$0xf]
        %v973 = vld [vmem:[%s959 + $0x34] sm:$0xf]
        %v974 = vld [vmem:[%s959 + $0x38] sm:$0xf]
        %v975 = vld [vmem:[%s959 + $0x3c] sm:$0xf]
        %v981 = vunpack.c.l.b16 %v937
        %v982 = vunpack.c.l.b16 %v938
        %v983 = vunpack.c.l.b16 %v939
        %v984 = vunpack.c.l.b16 %v940
        %v985 = vunpack.c.l.b16 %v958
        %v986 = vpack.c.b16 %v982, %v981
        %v987 = vpack.c.b16 %v984, %v983
        %v988 = vpack.c.b16 %v985, %v985
        %v990 = vshrl.u32 %v986, 16
        %v992 = vshll.u32 %v986, 16
        %v994 = vrot.slane %v992, 1
        %v995 = vor.u32 %v990, %v994
        %v997 = vshll.u32 %v987, 16
        %v999 = vrot.slane %v997, 1
        %v1000 = vsel %vm455, %v995, %v999
        %v1001 = vshrl.u32 %v987, 16
        %v1003 = vor.u32 %v1001, %v999
        %v1005 = vshll.u32 %v988, 16
        %v1007 = vrot.slane %v1005, 1
        %v1008 = vsel %vm455, %v1003, %v1007
        %v1009 = vshrl.u32 %v988, 16
        %v1011 = vor.u32 %v1009, %v1007
        %v1031 = vunpack.c.l.b16 %v960
        %v1032 = vunpack.c.l.b16 %v961
        %v1033 = vunpack.c.l.b16 %v962
        %v1034 = vunpack.c.l.b16 %v963
        %v1035 = vunpack.c.l.b16 %v964
        %v1036 = vunpack.c.l.b16 %v965
        %v1037 = vunpack.c.l.b16 %v966
        %v1038 = vunpack.c.l.b16 %v967
        %v1039 = vunpack.c.l.b16 %v968
        %v1040 = vunpack.c.l.b16 %v969
        %v1041 = vunpack.c.l.b16 %v970
        %v1042 = vunpack.c.l.b16 %v971
        %v1043 = vunpack.c.l.b16 %v972
        %v1044 = vunpack.c.l.b16 %v973
        %v1045 = vunpack.c.l.b16 %v974
        %v1046 = vunpack.c.l.b16 %v975
        %v1047 = vpack.c.b16 %v1032, %v1031
        %v1048 = vpack.c.b16 %v1034, %v1033
        %v1049 = vpack.c.b16 %v1036, %v1035
        %v1050 = vpack.c.b16 %v1038, %v1037
        %v1051 = vpack.c.b16 %v1040, %v1039
        %v1052 = vpack.c.b16 %v1042, %v1041
        %v1053 = vpack.c.b16 %v1044, %v1043
        %v1054 = vpack.c.b16 %v1046, %v1045
        %1063 = vmatprep.subr.bf16.mxu0 0
        %1064 = vmatpush1.bf16.msra.mxu0 %v1047
        %1065 = vmatprep.subr.bf16.mxu0 0
        %1066 = vmatpush1.bf16.msra.mxu0 %v1048
        %1067 = vmatprep.subr.bf16.mxu0 0
        %1068 = vmatpush1.bf16.msra.mxu0 %v1049
        %1069 = vmatprep.subr.bf16.mxu0 0
        %1070 = vmatpush1.bf16.msra.mxu0 %v1050
        %1071 = vmatprep.subr.bf16.mxu0 0
        %1072 = vmatpush1.bf16.msra.mxu0 %v1051
        %1073 = vmatprep.subr.bf16.mxu0 0
        %1074 = vmatpush1.bf16.msra.mxu0 %v1052
        %1075 = vmatprep.subr.bf16.mxu0 0
        %1076 = vmatpush1.bf16.msra.mxu0 %v1053
        %1077 = vmatprep.subr.bf16.mxu0 0
        %1078 = vmatpush1.bf16.msra.mxu0 %v1054
        %1079 = vmatprep.subr.bf16.mxu0 0
        %1080 = vmatpush1.bf16.msra.mxu0 0
        %1081 = vmatprep.subr.bf16.mxu0 0
        %1082 = vmatpush1.bf16.msra.mxu0 0
        %1083 = vmatprep.subr.bf16.mxu0 0
        %1084 = vmatpush1.bf16.msra.mxu0 0
        %1085 = vmatprep.subr.bf16.mxu0 0
        %1086 = vmatpush1.bf16.msra.mxu0 0
        %1087 = vmatprep.subr.bf16.mxu0 0
        %1088 = vmatpush1.bf16.msra.mxu0 0
        %1089 = vmatprep.subr.bf16.mxu0 0
        %1090 = vmatpush1.bf16.msra.mxu0 0
        %1091 = vmatprep.subr.bf16.mxu0 0
        %1092 = vmatpush1.bf16.msra.mxu0 0
        %1093 = vmatprep.subr.bf16.mxu0 0
        %1094 = vmatpush1.bf16.msra.mxu0 0
        %1095 = vmatprep.mubr.bf16.mxu0 0
        %1096 = vmatmul.mubr.bf16.gmra.mrb[0].mxu0 %v1000
        %v1097 = vpop.f32.mrb[0].mxu0
        %v1098 = vadd.f32 0.0, %v1097
        %v1099 = vpop.f32.mrb[0].mxu0
        %v1100 = vpop.f32.mrb[0].mxu0
        %v1101 = vadd.f32 0.0, %v1100
        %v1102 = vpop.f32.mrb[0].mxu0
        %1103 = vmatprep.mubr.bf16.mxu0 0
        %1104 = vmatmul.mubr.bf16.gmra.mrb[0].mxu0 %v1008
        %v1105 = vpop.f32.mrb[0].mxu0
        %v1106 = vadd.f32 0.0, %v1105
        %v1107 = vpop.f32.mrb[0].mxu0
        %v1108 = vpop.f32.mrb[0].mxu0
        %v1109 = vadd.f32 0.0, %v1108
        %v1110 = vpop.f32.mrb[0].mxu0
        %1111 = vmatprep.mubr.bf16.mxu0 0
        %1112 = vmatmul.mubr.bf16.gmra.mrb[0].mxu0 %v1011
        %v1113 = vpop.f32.mrb[0].mxu0
        %v1114 = vadd.f32 0.0, %v1113
        %v1115 = vpop.f32.mrb[0].mxu0
        %v1116 = vpop.f32.mrb[0].mxu0
        %v1117 = vpop.f32.mrb[0].mxu0
        %1118 = vdwg.mxu0
        %v1120 = vunpack.c.l.b16 %v941
        %v1121 = vpack.c.b16 %v1120, %v1120
        %v1141 = vunpack.c.l.b16 %v942
        %v1142 = vunpack.c.l.b16 %v943
        %v1143 = vunpack.c.l.b16 %v944
        %v1144 = vunpack.c.l.b16 %v945
        %v1145 = vunpack.c.l.b16 %v946
        %v1146 = vunpack.c.l.b16 %v947
        %v1147 = vunpack.c.l.b16 %v948
        %v1148 = vunpack.c.l.b16 %v949
        %v1149 = vunpack.c.l.b16 %v950
        %v1150 = vunpack.c.l.b16 %v951
        %v1151 = vunpack.c.l.b16 %v952
        %v1152 = vunpack.c.l.b16 %v953
        %v1153 = vunpack.c.l.b16 %v954
        %v1154 = vunpack.c.l.b16 %v955
        %v1155 = vunpack.c.l.b16 %v956
        %v1156 = vunpack.c.l.b16 %v957
        %v1157 = vpack.c.b16 %v1142, %v1141
        %v1158 = vpack.c.b16 %v1144, %v1143
        %v1159 = vpack.c.b16 %v1146, %v1145
        %v1160 = vpack.c.b16 %v1148, %v1147
        %v1161 = vpack.c.b16 %v1150, %v1149
        %v1162 = vpack.c.b16 %v1152, %v1151
        %v1163 = vpack.c.b16 %v1154, %v1153
        %v1164 = vpack.c.b16 %v1156, %v1155
        %1173 = vmatprep.subr.bf16.mxu0 0
        %1174 = vmatpush1.bf16.msra.mxu0 %v1157
        %1175 = vmatprep.subr.bf16.mxu0 0
        %1176 = vmatpush1.bf16.msra.mxu0 %v1158
        %1177 = vmatprep.subr.bf16.mxu0 0
        %1178 = vmatpush1.bf16.msra.mxu0 %v1159
        %1179 = vmatprep.subr.bf16.mxu0 0
        %1180 = vmatpush1.bf16.msra.mxu0 %v1160
        %1181 = vmatprep.subr.bf16.mxu0 0
        %1182 = vmatpush1.bf16.msra.mxu0 %v1161
        %1183 = vmatprep.subr.bf16.mxu0 0
        %1184 = vmatpush1.bf16.msra.mxu0 %v1162
        %1185 = vmatprep.subr.bf16.mxu0 0
        %1186 = vmatpush1.bf16.msra.mxu0 %v1163
        %1187 = vmatprep.subr.bf16.mxu0 0
        %1188 = vmatpush1.bf16.msra.mxu0 %v1164
        %1189 = vmatprep.subr.bf16.mxu0 0
        %1190 = vmatpush1.bf16.msra.mxu0 0
        %1191 = vmatprep.subr.bf16.mxu0 0
        %1192 = vmatpush1.bf16.msra.mxu0 0
        %1193 = vmatprep.subr.bf16.mxu0 0
        %1194 = vmatpush1.bf16.msra.mxu0 0
        %1195 = vmatprep.subr.bf16.mxu0 0
        %1196 = vmatpush1.bf16.msra.mxu0 0
        %1197 = vmatprep.subr.bf16.mxu0 0
        %1198 = vmatpush1.bf16.msra.mxu0 0
        %1199 = vmatprep.subr.bf16.mxu0 0
        %1200 = vmatpush1.bf16.msra.mxu0 0
        %1201 = vmatprep.subr.bf16.mxu0 0
        %1202 = vmatpush1.bf16.msra.mxu0 0
        %1203 = vmatprep.subr.bf16.mxu0 0
        %1204 = vmatpush1.bf16.msra.mxu0 0
        %1205 = vmatprep.mubr.bf16.mxu0 0
        %1206 = vmatmul.mubr.bf16.gmra.mrb[0].mxu0 %v986
        %v1207 = vpop.f32.mrb[0].mxu0
        %v1208 = vadd.f32 %v1098, %v1207
        %v1209 = vpop.f32.mrb[0].mxu0
        %v1210 = vpop.f32.mrb[0].mxu0
        %v1211 = vadd.f32 %v1101, %v1210
        %v1212 = vpop.f32.mrb[0].mxu0
        %1213 = vmatprep.mubr.bf16.mxu0 0
        %1214 = vmatmul.mubr.bf16.gmra.mrb[0].mxu0 %v987
        %v1215 = vpop.f32.mrb[0].mxu0
        %v1216 = vadd.f32 %v1106, %v1215
        %v1217 = vpop.f32.mrb[0].mxu0
        %v1218 = vpop.f32.mrb[0].mxu0
        %v1219 = vadd.f32 %v1109, %v1218
        %v1220 = vpop.f32.mrb[0].mxu0
        %1221 = vmatprep.mubr.bf16.mxu0 0
        %1222 = vmatmul.mubr.bf16.gmra.mrb[0].mxu0 %v1121
        %v1223 = vpop.f32.mrb[0].mxu0
        %v1224 = vadd.f32 %v1114, %v1223
        %v1225 = vpop.f32.mrb[0].mxu0
        %v1226 = vpop.f32.mrb[0].mxu0
        %v1227 = vpop.f32.mrb[0].mxu0
        %1228 = vdwg.mxu0
        %v1229 = vld [vmem:[#allocation3] sm:$0xe]
        %s1230 = scalar_lea.vmem [#allocation9], 128
        %v1231 = vld [vmem:[%s1230] sm:$0xf]
        %v1232 = vld [vmem:[%s1230 + $0x4] sm:$0xf]
        %v1233 = vld [vmem:[%s1230 + $0x8] sm:$0xf]
        %v1234 = vld [vmem:[%s1230 + $0xc] sm:$0xf]
        %v1235 = vld [vmem:[%s1230 + $0x10] sm:$0xf]
        %v1236 = vld [vmem:[%s1230 + $0x14] sm:$0xf]
        %v1237 = vld [vmem:[%s1230 + $0x18] sm:$0xf]
        %v1238 = vld [vmem:[%s1230 + $0x1c] sm:$0xf]
        %v1239 = vld [vmem:[%s1230 + $0x20] sm:$0xf]
        %v1240 = vld [vmem:[%s1230 + $0x24] sm:$0xf]
        %v1241 = vld [vmem:[%s1230 + $0x28] sm:$0xf]
        %v1242 = vld [vmem:[%s1230 + $0x2c] sm:$0xf]
        %v1243 = vld [vmem:[%s1230 + $0x30] sm:$0xf]
        %v1244 = vld [vmem:[%s1230 + $0x34] sm:$0xf]
        %v1245 = vld [vmem:[%s1230 + $0x38] sm:$0xf]
        %v1246 = vld [vmem:[%s1230 + $0x3c] sm:$0xf]
        %v1248 = vunpack.c.l.b16 %v1229
        %v1249 = vpack.c.b16 %v982, %v1248
        %v1250 = vrot.slane %v1249, 1
        %v1251 = vrot.slane %v987, 1
        %v1252 = vsel %vm717, %v1250, %v1251
        %v1253 = vrot.slane %v988, 1
        %v1254 = vsel %vm717, %v1251, %v1253
        %v1274 = vunpack.c.l.b16 %v1231
        %v1275 = vunpack.c.l.b16 %v1232
        %v1276 = vunpack.c.l.b16 %v1233
        %v1277 = vunpack.c.l.b16 %v1234
        %v1278 = vunpack.c.l.b16 %v1235
        %v1279 = vunpack.c.l.b16 %v1236
        %v1280 = vunpack.c.l.b16 %v1237
        %v1281 = vunpack.c.l.b16 %v1238
        %v1282 = vunpack.c.l.b16 %v1239
        %v1283 = vunpack.c.l.b16 %v1240
        %v1284 = vunpack.c.l.b16 %v1241
        %v1285 = vunpack.c.l.b16 %v1242
        %v1286 = vunpack.c.l.b16 %v1243
        %v1287 = vunpack.c.l.b16 %v1244
        %v1288 = vunpack.c.l.b16 %v1245
        %v1289 = vunpack.c.l.b16 %v1246
        %v1290 = vpack.c.b16 %v1275, %v1274
        %v1291 = vpack.c.b16 %v1277, %v1276
        %v1292 = vpack.c.b16 %v1279, %v1278
        %v1293 = vpack.c.b16 %v1281, %v1280
        %v1294 = vpack.c.b16 %v1283, %v1282
        %v1295 = vpack.c.b16 %v1285, %v1284
        %v1296 = vpack.c.b16 %v1287, %v1286
        %v1297 = vpack.c.b16 %v1289, %v1288
        %1306 = vmatprep.subr.bf16.mxu0 0
        %1307 = vmatpush1.bf16.msra.mxu0 %v1290
        %1308 = vmatprep.subr.bf16.mxu0 0
        %1309 = vmatpush1.bf16.msra.mxu0 %v1291
        %1310 = vmatprep.subr.bf16.mxu0 0
        %1311 = vmatpush1.bf16.msra.mxu0 %v1292
        %1312 = vmatprep.subr.bf16.mxu0 0
        %1313 = vmatpush1.bf16.msra.mxu0 %v1293
        %1314 = vmatprep.subr.bf16.mxu0 0
        %1315 = vmatpush1.bf16.msra.mxu0 %v1294
        %1316 = vmatprep.subr.bf16.mxu0 0
        %1317 = vmatpush1.bf16.msra.mxu0 %v1295
        %1318 = vmatprep.subr.bf16.mxu0 0
        %1319 = vmatpush1.bf16.msra.mxu0 %v1296
        %1320 = vmatprep.subr.bf16.mxu0 0
        %1321 = vmatpush1.bf16.msra.mxu0 %v1297
        %1322 = vmatprep.subr.bf16.mxu0 0
        %1323 = vmatpush1.bf16.msra.mxu0 0
        %1324 = vmatprep.subr.bf16.mxu0 0
        %1325 = vmatpush1.bf16.msra.mxu0 0
        %1326 = vmatprep.subr.bf16.mxu0 0
        %1327 = vmatpush1.bf16.msra.mxu0 0
        %1328 = vmatprep.subr.bf16.mxu0 0
        %1329 = vmatpush1.bf16.msra.mxu0 0
        %1330 = vmatprep.subr.bf16.mxu0 0
        %1331 = vmatpush1.bf16.msra.mxu0 0
        %1332 = vmatprep.subr.bf16.mxu0 0
        %1333 = vmatpush1.bf16.msra.mxu0 0
        %1334 = vmatprep.subr.bf16.mxu0 0
        %1335 = vmatpush1.bf16.msra.mxu0 0
        %1336 = vmatprep.subr.bf16.mxu0 0
        %1337 = vmatpush1.bf16.msra.mxu0 0
        %1338 = vmatprep.mubr.bf16.mxu0 0
        %1339 = vmatmul.mubr.bf16.gmra.mrb[0].mxu0 %v1252
        %v1340 = vpop.f32.mrb[0].mxu0
        %v1341 = vadd.f32 0.0, %v1340
        %v1342 = vpop.f32.mrb[0].mxu0
        %v1343 = vpop.f32.mrb[0].mxu0
        %v1344 = vadd.f32 0.0, %v1343
        %v1345 = vpop.f32.mrb[0].mxu0
        %1346 = vmatprep.mubr.bf16.mxu0 0
        %1347 = vmatmul.mubr.bf16.gmra.mrb[0].mxu0 %v1254
        %v1348 = vpop.f32.mrb[0].mxu0
        %v1349 = vadd.f32 0.0, %v1348
        %v1350 = vpop.f32.mrb[0].mxu0
        %v1351 = vpop.f32.mrb[0].mxu0
        %v1352 = vadd.f32 0.0, %v1351
        %v1353 = vpop.f32.mrb[0].mxu0
        %1354 = vmatprep.mubr.bf16.mxu0 0
        %1355 = vmatmul.mubr.bf16.gmra.mrb[0].mxu0 %v1253
        %v1356 = vpop.f32.mrb[0].mxu0
        %v1357 = vadd.f32 0.0, %v1356
        %v1358 = vpop.f32.mrb[0].mxu0
        %v1359 = vpop.f32.mrb[0].mxu0
        %v1360 = vpop.f32.mrb[0].mxu0
        %1361 = vdwg.mxu0
        %v1362 = vadd.f32 %v1208, %v1341
        %v1363 = vadd.f32 %v1211, %v1344
        %v1364 = vadd.f32 %v1216, %v1349
        %v1365 = vadd.f32 %v1219, %v1352
        %v1366 = vadd.f32 %v1224, %v1357
        %v1367 = vld [vmem:[%s4] sm:$0x1]
        %v1369 = vlaneseq
        %v1370 = vshrl.u32 %v1369, 7
        %v1371 = vsub.s32 0, %v1370
        %v1372 = vrot.slane %v1367, %v1371
        %v1374 = vadd.f32 %v1362, %v1372
        %v1375 = vadd.f32 %v1363, %v1372
        %v1376 = vld [vmem:[%s238] sm:$0xff]
        %v1377 = vld [vmem:[%s238 + $0x8] sm:$0xff]
        %v1378 = vadd.f32 %v1374, %v1376
        %v1379 = vadd.f32 %v1375, %v1377
        %1380 = vst [vmem:[%s272] sm:$0xff] %v1378
        %1381 = vst [vmem:[%s272 + $0x8] sm:$0xff] %v1379
        %v1382 = vld [vmem:[%s4] sm:$0x1]
        %v1384 = vlaneseq
        %v1385 = vshrl.u32 %v1384, 7
        %v1386 = vsub.s32 0, %v1385
        %v1387 = vrot.slane %v1382, %v1386
        %v1389 = vadd.f32 %v1364, %v1387
        %v1390 = vadd.f32 %v1365, %v1387
        %v1391 = vadd.f32 %v1366, %v1387
        %v1392 = vld [vmem:[%s357] sm:$0xff]
        %v1393 = vld [vmem:[%s357 + $0x8] sm:$0xff]
        %vm1396 = vcmask 1041408
        %v1397 = vrot.slane %v1392, 6
        %v1398 = vrot.slane %v1393, 6
        %v1399 = vsel %vm1396, %v1397, %v1398
        %v1403 = vadd.f32 %v1389, %v1397
        %v1404 = vadd.f32 %v1390, %v1399
        %v1405 = vadd.f32 %v1391, %v1398
        %s1406 = scalar_lea.vmem %s272, 16 [#allocation10]
        %1407 = vst [vmem:[%s1406 - $0x2] sm:$0xfc] %v1403
        %1408 = vst [vmem:[%s1406 + $0x6] sm:$0xff] %v1404
        %1409 = vst [vmem:[%s1406 + $0xe] sm:$0x3] %v1405
        %s1410 = sand.u32 %s141, 1
        %s1411 = scalar_lea.sflag [#allocation6], %s1410
        %s1412 = sand.u32 %s141, 1
        %s1413 = smul.addr %s1412, 32
        %s1414 = scalar_lea.vmem [#allocation10], %s1413
        // Predicated region
        $region57: #{basic_block_apply.1} parent=39 // pred_check
          %p1415 = pneg %p151
        $region58: #{basic_block_apply.1} parent=39 // pred_check_branch
          %1417 = sbr.rel (%p1415) target = $region60
        $region59: #{basic_block_apply.1} parent=39 // pred_region
          %s1418 = smul.u32 2, %s23
          %s1420 = ssub.s32 512, 512
          %1421 = vsyncadd %s1411, %s1420
          %s1422 = smul.addr %s1418, 2
          %s1423 = smul.addr %s1422, 128
          %s1424 = scalar_lea.hbm %s5, %s1423
          %s1425 = sshll.u32 %s1414, 4
          %s1426 = int_to_ptr.vmem [resolvable:$true] %s1425
          %1431 = dma.vmem_to_hbm [thread:$0]  %s1426, 512, %s1424, %s1411, 128, 128, 8
        $region60: #{basic_block_apply.1} parent=39 // pred_fallthru
          _
      $region40: #{basic_block_apply.1} parent=5 // pred_fallthru
        _
      %p1432 = scmp.le.s32.totalorder 2, %s18
      // Predicated region
      $region61: #{basic_block_apply.1} parent=5 // pred_check
        %p1433 = pneg %p1432
      $region62: #{basic_block_apply.1} parent=5 // pred_check_branch
        %1435 = sbr.rel (%p1433) target = $region64
      $region63: #{basic_block_apply.1} parent=5 // pred_region
        %s1436 = ssub.s32 %s18, 2
        // Predicated region
        $region65: #{basic_block_apply.1} parent=63 // pred_check
          %p1437 = pneg %p157
        $region66: #{basic_block_apply.1} parent=63 // pred_check_branch
          %1439 = sbr.rel (%p1437) target = $region68
        $region67: #{basic_block_apply.1} parent=63 // pred_region
          %s1440 = sand.u32 %s142, 1
          %s1441 = scalar_lea.sflag [#allocation6], %s1440
          %s1442 = sand.u32 %s142, 1
          %s1443 = smul.addr %s1442, 32
          %s1444 = scalar_lea.vmem [#allocation10], %s1443
          %1445 = dma.done %s1441, 512
        $region68: #{basic_block_apply.1} parent=63 // pred_fallthru
          _
      $region64: #{basic_block_apply.1} parent=5 // pred_fallthru
        _
    $region6: #{basic_block_apply.1} parent=1 // loop_footer
      %s22 = sadd.s32 1, %s18
    $region7: #{basic_block_apply.1} parent=1 // loop_footer_branch
      %17 = sbr.rel target = $region3
    $region8: #{basic_block_apply.1} parent=1 // loop_exit
      _
    %1446 = vsyncpa [#allocation5], 1
    %s1447 = scalar_lea.sflag [#allocation5], 1
    %1448 = vsyncpa %s1447, 1
    %1449 = vsyncpa [#allocation8], 1
    %1450 = vsyncpa [#allocation6], 1
    %s1451 = scalar_lea.sflag [#allocation6], 1
    %1452 = vsyncpa %s1451, 1

</llo_original>
